<compile_context>
chip_gen: v5e
topology: v5e:2x2
jax: 0.10.0
libtpu: 0.0.40
codegen_flags: <defaults>
</compile_context>

<pallas_src>
import jax
import jax.numpy as jnp
from jax import lax
from jax.experimental import pallas as pl
from jax.experimental.pallas import tpu as pltpu

EPS = 1e-5


def _conv_block_kernel(x_ref, scale_ref, shift_ref, w_ref, b_ref, out_ref):
    # x_ref    : (tile_h+2, W+2, cin_pad)   raw input tile incl. 1-row halos (f32)
    # scale_ref: (1, cin_pad)               folded BN scale = gamma * rsqrt(var+eps)
    # shift_ref: (1, cin_pad)               folded BN shift = beta - mean * scale
    # w_ref    : (9*cin_pad, cout_pad)      im2col conv weights, bf16
    # b_ref    : (1, cout_pad)              conv bias, f32
    # out_ref  : (tile_h*W, cout_pad)       lane-dense output block, f32
    hp, wp, cin = x_ref.shape
    tile_h, w = hp - 2, wp - 2

    x = x_ref[...]                                         # f32
    # BatchNorm affine (stats precomputed over full N*H*W) + ReLU, in f32.
    xn = x * scale_ref[...].reshape(1, 1, cin) + shift_ref[...].reshape(1, 1, cin)
    xr = jnp.maximum(xn, 0.0)

    # Re-zero the conv zero-padding positions (the affine maps padded zeros to
    # relu(shift)). Halo rows hold real neighbour rows except on the first/last
    # H-tile; columns 0 and W+1 are always padding.
    j = pl.program_id(1)
    last = pl.num_programs(1) - 1
    row_lo = jnp.where(j > 0, 0, 1)
    row_hi = jnp.where(j < last, tile_h + 1, tile_h)
    hh = lax.broadcasted_iota(jnp.int32, (hp, wp, 1), 0)
    ww = lax.broadcasted_iota(jnp.int32, (hp, wp, 1), 1)
    valid = (hh >= row_lo) & (hh <= row_hi) & (ww >= 1) & (ww <= w)
    xr = jnp.where(valid, xr, 0.0).astype(jnp.bfloat16)    # MXU operand in bf16

    # im2col: 9 shifted views concatenated on the (128-aligned) lane axis, then
    # a single (tile_h*W, 9*cin) x (9*cin, cout) MXU matmul, f32 accumulation.
    cols = [xr[ky:ky + tile_h, kx:kx + w, :]
            for ky in range(3) for kx in range(3)]
    patches = jnp.concatenate(cols, axis=-1).reshape(tile_h * w, 9 * cin)
    acc = jnp.dot(patches, w_ref[...], preferred_element_type=jnp.float32)
    out_ref[...] = acc + b_ref[...]


def conv_block_pallas(x_nhwc, gamma, beta, w_hwio, bias, tile_h=8):
    """One BN -> ReLU -> Conv3x3(pad=1) block as a gridded Pallas kernel."""
    N, H, W, Cin = x_nhwc.shape
    Cout = w_hwio.shape[-1]
    if H % tile_h:
        tile_h = H                      # fallback: single H-tile
    T = H // tile_h
    cin_pad = ((Cin + 127) // 128) * 128
    cout_pad = ((Cout + 127) // 128) * 128

    # --- BN statistics hoisted out of the kernel (global over N*H*W), stable
    #     two-pass biased variance, folded with gamma/beta into scale/shift.
    mean = jnp.mean(x_nhwc, axis=(0, 1, 2))
    var = jnp.var(x_nhwc, axis=(0, 1, 2))
    scale = (gamma * lax.rsqrt(var + EPS)).astype(jnp.float32)
    shift = (beta - mean * scale).astype(jnp.float32)
    scale = jnp.pad(scale, (0, cin_pad - Cin)).reshape(1, cin_pad)
    shift = jnp.pad(shift, (0, cin_pad - Cin)).reshape(1, cin_pad)

    # --- layout glue (XLA): 1-px zero spatial pad, channels padded to a
    #     lane-dense multiple of 128, overlapping H-tiles carrying their halos.
    xp = jnp.pad(x_nhwc, ((0, 0), (1, 1), (1, 1), (0, cin_pad - Cin)))
    x_tiles = jnp.stack(
        [xp[:, j * tile_h:j * tile_h + tile_h + 2] for j in range(T)], axis=1)
    # x_tiles: (N, T, tile_h+2, W+2, cin_pad)

    # --- im2col weights (bf16 MXU operands), zero-padded to lane-dense Cout.
    w_p = jnp.pad(w_hwio,
                  ((0, 0), (0, 0), (0, cin_pad - Cin), (0, cout_pad - Cout)))
    w2d = w_p.reshape(9 * cin_pad, cout_pad).astype(jnp.bfloat16)
    b2d = jnp.pad(bias, (0, cout_pad - Cout)).reshape(1, cout_pad).astype(jnp.float32)

    out = pl.pallas_call(
        _conv_block_kernel,
        out_shape=jax.ShapeDtypeStruct((N, H * W, cout_pad), jnp.float32),
        grid_spec=pltpu.PrefetchScalarGridSpec(
            num_scalar_prefetch=0,
            grid=(N, T),
            in_specs=[
                pl.BlockSpec((None, None, tile_h + 2, W + 2, cin_pad),
                             lambda n, j: (n, j, 0, 0, 0)),
                pl.BlockSpec((1, cin_pad), lambda n, j: (0, 0)),
                pl.BlockSpec((1, cin_pad), lambda n, j: (0, 0)),
                pl.BlockSpec((9 * cin_pad, cout_pad), lambda n, j: (0, 0)),
                pl.BlockSpec((1, cout_pad), lambda n, j: (0, 0)),
            ],
            out_specs=pl.BlockSpec((None, tile_h * W, cout_pad),
                                   lambda n, j: (n, j, 0)),
        ),
        compiler_params=pltpu.CompilerParams(
            dimension_semantics=("parallel", "parallel"),
            vmem_limit_bytes=32 * 1024 * 1024),
    )(x_tiles, scale, shift, w2d, b2d)

    return out.reshape(N, H, W, cout_pad)[..., :Cout]


def init_dense_block_params(key, num_convs, input_channels, num_channels):
    """Deterministic synthetic parameters (shapes match the PyTorch module)."""
    params = []
    for i in range(num_convs):
        cin = input_channels + i * num_channels
        key, k1, k2, k3, k4 = jax.random.split(key, 5)
        gamma = 1.0 + 0.1 * jax.random.normal(k1, (cin,), jnp.float32)
        beta = 0.1 * jax.random.normal(k2, (cin,), jnp.float32)
        # PyTorch Conv2d weight is (Cout, Cin, 3, 3); store as HWIO for NHWC.
        w_oihw = 0.1 * jax.random.normal(k3, (num_channels, cin, 3, 3), jnp.float32)
        w_hwio = jnp.transpose(w_oihw, (2, 3, 1, 0))
        bias = 0.1 * jax.random.normal(k4, (num_channels,), jnp.float32)
        params.append((gamma, beta, w_hwio, bias))
    return params


def dense_block_forward(x_nchw, params):
    """DenseBlock.forward: X = cat([X, blk(X)], channel) for each block,
    realized as a preallocated channel buffer updated in place under jit."""
    x0 = jnp.transpose(x_nchw, (0, 2, 3, 1))               # NCHW -> NHWC
    N, H, W, c0 = x0.shape
    c_total = c0 + sum(int(b.shape[0]) for _, _, _, b in params)
    buf = jnp.zeros((N, H, W, c_total), x0.dtype)
    buf = lax.dynamic_update_slice(buf, x0, (0, 0, 0, 0))
    c = c0
    for gamma, beta, w_hwio, bias in params:
        y = conv_block_pallas(buf[..., :c], gamma, beta, w_hwio, bias)
        buf = lax.dynamic_update_slice(buf, y, (0, 0, 0, c))
        c += int(bias.shape[0])
    return jnp.transpose(buf, (0, 3, 1, 2))                # NHWC -> NCHW


# ----------------------------- pure-JAX references ----------------------------
def _ref_conv_block(x_nhwc, gamma, beta, w_hwio, bias, matmul_dtype):
    mean = jnp.mean(x_nhwc, axis=(0, 1, 2))
    var = jnp.var(x_nhwc, axis=(0, 1, 2))
    scale = gamma * lax.rsqrt(var + EPS)
    shift = beta - mean * scale
    xr = jnp.maximum(x_nhwc * scale + shift, 0.0)
    y = lax.conv_general_dilated(
        xr.astype(matmul_dtype), w_hwio.astype(matmul_dtype),
        window_strides=(1, 1), padding="SAME",
        dimension_numbers=("NHWC", "HWIO", "NHWC"),
        preferred_element_type=jnp.float32)
    return y + bias


def dense_block_ref(x_nchw, params, matmul_dtype=jnp.float32):
    x = jnp.transpose(x_nchw, (0, 2, 3, 1))
    for gamma, beta, w_hwio, bias in params:
        y = _ref_conv_block(x, gamma, beta, w_hwio, bias, matmul_dtype)
        x = jnp.concatenate([x, y], axis=-1)
    return jnp.transpose(x, (0, 3, 1, 2))


if __name__ == "__main__":
    num_convs, input_channels, num_channels = 2, 4, 8
    N, H, W = 2, 16, 16

    key = jax.random.PRNGKey(0)
    key, kx, kp = jax.random.split(key, 3)
    x = jax.random.normal(kx, (N, input_channels, H, W), jnp.float32)   # NCHW
    params = init_dense_block_params(kp, num_convs, input_channels, num_channels)

    fwd = jax.jit(dense_block_forward)
    out = jax.block_until_ready(fwd(x, params))

    expected_channels = input_channels + num_convs * num_channels
    assert out.shape == (N, expected_channels, H, W), out.shape

    # Tight check vs. a matched-precision reference (bf16 conv operands,
    # f32 accumulation) -- validates the Pallas kernel itself.
    ref_bf16 = jax.block_until_ready(dense_block_ref(x, params, jnp.bfloat16))
    err_m = float(jnp.max(jnp.abs(out - ref_bf16)))
    assert jnp.allclose(out, ref_bf16, atol=1e-2, rtol=1e-2), err_m

    # Check vs. the full-f32 reference (PyTorch-style forward); tolerance covers
    # the bf16 rounding of the MXU operands.
    ref_f32 = jax.block_until_ready(dense_block_ref(x, params, jnp.float32))
    err_s = float(jnp.max(jnp.abs(out - ref_f32)))
    assert jnp.allclose(out, ref_f32, atol=5e-2, rtol=5e-2), err_s

    print("KERNEL_OK")
</pallas_src>

<mosaic_0001>
module attributes {stable_mosaic.version = 11 : i64} {
  func.func @_conv_block_kernel(%arg0: i32, %arg1: i32, %arg2: memref<1x1x10x18x128xf32, #tpu.memory_space<vmem>>, %arg3: memref<1x128xf32, #tpu.memory_space<vmem>>, %arg4: memref<1x128xf32, #tpu.memory_space<vmem>>, %arg5: memref<1152x128xbf16, #tpu.memory_space<vmem>>, %arg6: memref<1x128xf32, #tpu.memory_space<vmem>>, %arg7: memref<1x128x128xf32, #tpu.memory_space<vmem>>) attributes {dimension_semantics = [#tpu.dimension_semantics<parallel>, #tpu.dimension_semantics<parallel>], iteration_bounds = array<i64: 2, 2>, scalar_prefetch = 0 : i64, scratch_operands = 0 : i64, tpu.core_type = #tpu.core_type<tc>, window_params = [{transform_indices = @transform_0, window_bounds = array<i64: 1, 1, 10, 18, 128>}, {pipeline_mode = #tpu.pipeline_mode<synchronous>, transform_indices = @transform_1, window_bounds = array<i64: 1, 128>}, {pipeline_mode = #tpu.pipeline_mode<synchronous>, transform_indices = @transform_2, window_bounds = array<i64: 1, 128>}, {pipeline_mode = #tpu.pipeline_mode<synchronous>, transform_indices = @transform_3, window_bounds = array<i64: 1152, 128>}, {pipeline_mode = #tpu.pipeline_mode<synchronous>, transform_indices = @transform_4, window_bounds = array<i64: 1, 128>}, {transform_indices = @transform_5, window_bounds = array<i64: 1, 128, 128>}]} {
    %c0 = arith.constant 0 : index
    %c0_0 = arith.constant 0 : index
    %c0_1 = arith.constant 0 : index
    %c0_2 = arith.constant 0 : index
    %c0_3 = arith.constant 0 : index
    %0 = vector.load %arg2[%c0, %c0_0, %c0_1, %c0_2, %c0_3] : memref<1x1x10x18x128xf32, #tpu.memory_space<vmem>>, vector<1x1x10x18x128xf32>
    %1 = vector.shape_cast %0 : vector<1x1x10x18x128xf32> to vector<10x18x128xf32>
    %c0_4 = arith.constant 0 : index
    %c0_5 = arith.constant 0 : index
    %2 = vector.load %arg3[%c0_4, %c0_5] : memref<1x128xf32, #tpu.memory_space<vmem>>, vector<1x128xf32>
    %3 = vector.shape_cast %2 : vector<1x128xf32> to vector<1x1x128xf32>
    %4 = vector.broadcast %3 : vector<1x1x128xf32> to vector<10x18x128xf32>
    %5 = arith.mulf %1, %4 : vector<10x18x128xf32>
    %c0_6 = arith.constant 0 : index
    %c0_7 = arith.constant 0 : index
    %6 = vector.load %arg4[%c0_6, %c0_7] : memref<1x128xf32, #tpu.memory_space<vmem>>, vector<1x128xf32>
    %7 = vector.shape_cast %6 : vector<1x128xf32> to vector<1x1x128xf32>
    %8 = vector.broadcast %7 : vector<1x1x128xf32> to vector<10x18x128xf32>
    %9 = arith.addf %5, %8 : vector<10x18x128xf32>
    %cst = arith.constant 0.000000e+00 : f32
    %10 = vector.broadcast %cst : f32 to vector<10x18x128xf32>
    %11 = arith.maximumf %9, %10 : vector<10x18x128xf32>
    %c0_i32 = arith.constant 0 : i32
    %12 = arith.cmpi sgt, %arg1, %c0_i32 : i32
    %c0_i32_8 = arith.constant 0 : i32
    %c1_i32 = arith.constant 1 : i32
    %13 = arith.select %12, %c0_i32_8, %c1_i32 : i32
    %c1_i32_9 = arith.constant 1 : i32
    %14 = arith.cmpi slt, %arg1, %c1_i32_9 : i32
    %c9_i32 = arith.constant 9 : i32
    %c8_i32 = arith.constant 8 : i32
    %15 = arith.select %14, %c9_i32, %c8_i32 : i32
    %16 = tpu.iota {dimensions = array<i32: 0>} : vector<10x18x1xi32>
    %17 = tpu.iota {dimensions = array<i32: 1>} : vector<10x18x1xi32>
    %18 = vector.broadcast %13 : i32 to vector<10x18x1xi32>
    %19 = arith.cmpi sge, %16, %18 : vector<10x18x1xi32>
    %20 = vector.broadcast %15 : i32 to vector<10x18x1xi32>
    %21 = arith.cmpi sle, %16, %20 : vector<10x18x1xi32>
    %22 = arith.andi %19, %21 : vector<10x18x1xi1>
    %c1_i32_10 = arith.constant 1 : i32
    %23 = vector.broadcast %c1_i32_10 : i32 to vector<10x18x1xi32>
    %24 = arith.cmpi sge, %17, %23 : vector<10x18x1xi32>
    %25 = arith.andi %22, %24 : vector<10x18x1xi1>
    %c16_i32 = arith.constant 16 : i32
    %26 = vector.broadcast %c16_i32 : i32 to vector<10x18x1xi32>
    %27 = arith.cmpi sle, %17, %26 : vector<10x18x1xi32>
    %28 = arith.andi %25, %27 : vector<10x18x1xi1>
    %cst_11 = arith.constant 0.000000e+00 : f32
    %29 = vector.shape_cast %28 : vector<10x18x1xi1> to vector<10x18x1xi1>
    %30 = vector.broadcast %29 : vector<10x18x1xi1> to vector<10x18x128xi1>
    %31 = vector.broadcast %cst_11 : f32 to vector<10x18x128xf32>
    %32 = arith.select %30, %11, %31 : vector<10x18x128xi1>, vector<10x18x128xf32>
    %33 = arith.truncf %32 : vector<10x18x128xf32> to vector<10x18x128xbf16>
    %34 = vector.extract_strided_slice %33 {offsets = [0, 0, 0], sizes = [8, 16, 128], strides = [1, 1, 1]} : vector<10x18x128xbf16> to vector<8x16x128xbf16>
    %35 = vector.extract_strided_slice %33 {offsets = [0, 1, 0], sizes = [8, 16, 128], strides = [1, 1, 1]} : vector<10x18x128xbf16> to vector<8x16x128xbf16>
    %36 = vector.extract_strided_slice %33 {offsets = [0, 2, 0], sizes = [8, 16, 128], strides = [1, 1, 1]} : vector<10x18x128xbf16> to vector<8x16x128xbf16>
    %37 = vector.extract_strided_slice %33 {offsets = [1, 0, 0], sizes = [8, 16, 128], strides = [1, 1, 1]} : vector<10x18x128xbf16> to vector<8x16x128xbf16>
    %38 = vector.extract_strided_slice %33 {offsets = [1, 1, 0], sizes = [8, 16, 128], strides = [1, 1, 1]} : vector<10x18x128xbf16> to vector<8x16x128xbf16>
    %39 = vector.extract_strided_slice %33 {offsets = [1, 2, 0], sizes = [8, 16, 128], strides = [1, 1, 1]} : vector<10x18x128xbf16> to vector<8x16x128xbf16>
    %40 = vector.extract_strided_slice %33 {offsets = [2, 0, 0], sizes = [8, 16, 128], strides = [1, 1, 1]} : vector<10x18x128xbf16> to vector<8x16x128xbf16>
    %41 = vector.extract_strided_slice %33 {offsets = [2, 1, 0], sizes = [8, 16, 128], strides = [1, 1, 1]} : vector<10x18x128xbf16> to vector<8x16x128xbf16>
    %42 = vector.extract_strided_slice %33 {offsets = [2, 2, 0], sizes = [8, 16, 128], strides = [1, 1, 1]} : vector<10x18x128xbf16> to vector<8x16x128xbf16>
    %43 = tpu.concatenate %34, %35, %36, %37, %38, %39, %40, %41, %42 in 2 : vector<8x16x128xbf16>, vector<8x16x128xbf16>, vector<8x16x128xbf16>, vector<8x16x128xbf16>, vector<8x16x128xbf16>, vector<8x16x128xbf16>, vector<8x16x128xbf16>, vector<8x16x128xbf16>, vector<8x16x128xbf16> -> vector<8x16x1152xbf16>
    %44 = vector.shape_cast %43 : vector<8x16x1152xbf16> to vector<128x1152xbf16>
    %c0_12 = arith.constant 0 : index
    %c0_13 = arith.constant 0 : index
    %45 = vector.load %arg5[%c0_12, %c0_13] : memref<1152x128xbf16, #tpu.memory_space<vmem>>, vector<1152x128xbf16>
    %cst_14 = arith.constant dense<0.000000e+00> : vector<128x128xf32>
    %46 = tpu.matmul %44, %45, %cst_14 {dimension_numbers = #tpu.dot_dimension_numbers<[1], [0], [0], [1], [0, 0, 1, 1], [], []>} : vector<128x1152xbf16>, vector<1152x128xbf16>, vector<128x128xf32> -> vector<128x128xf32>
    %c0_15 = arith.constant 0 : index
    %c0_16 = arith.constant 0 : index
    %47 = vector.load %arg6[%c0_15, %c0_16] : memref<1x128xf32, #tpu.memory_space<vmem>>, vector<1x128xf32>
    %48 = vector.broadcast %47 : vector<1x128xf32> to vector<128x128xf32>
    %49 = arith.addf %46, %48 : vector<128x128xf32>
    %c0_17 = arith.constant 0 : index
    %c0_18 = arith.constant 0 : index
    %c0_19 = arith.constant 0 : index
    %50 = vector.load %arg7[%c0_17, %c0_18, %c0_19] : memref<1x128x128xf32, #tpu.memory_space<vmem>>, vector<1x128x128xf32>
    %51 = vector.shape_cast %50 : vector<1x128x128xf32> to vector<128x128xf32>
    %52 = vector.shape_cast %49 : vector<128x128xf32> to vector<1x128x128xf32>
    tpu.vector_store %arg7[%c0_17, %c0_18, %c0_19], %52 {strides = array<i32>} : memref<1x128x128xf32, #tpu.memory_space<vmem>>, vector<1x128x128xf32>,
    return
  }
  func.func @transform_0(%arg0: i32, %arg1: i32) -> (i32, i32, i32, i32, i32) {
    %c0_i32 = arith.constant 0 : i32
    %c0_i32_0 = arith.constant 0 : i32
    %c0_i32_1 = arith.constant 0 : i32
    %c0_i32_2 = arith.constant 0 : i32
    return %arg0, %arg1, %c0_i32, %c0_i32_0, %c0_i32_1 : i32, i32, i32, i32, i32
  }
  func.func @transform_1(%arg0: i32, %arg1: i32) -> (i32, i32) {
    %c0_i32 = arith.constant 0 : i32
    %c0_i32_0 = arith.constant 0 : i32
    %c0_i32_1 = arith.constant 0 : i32
    return %c0_i32, %c0_i32_0 : i32, i32
  }
  func.func @transform_2(%arg0: i32, %arg1: i32) -> (i32, i32) {
    %c0_i32 = arith.constant 0 : i32
    %c0_i32_0 = arith.constant 0 : i32
    %c0_i32_1 = arith.constant 0 : i32
    return %c0_i32, %c0_i32_0 : i32, i32
  }
  func.func @transform_3(%arg0: i32, %arg1: i32) -> (i32, i32) {
    %c0_i32 = arith.constant 0 : i32
    %c0_i32_0 = arith.constant 0 : i32
    %c0_i32_1 = arith.constant 0 : i32
    return %c0_i32, %c0_i32_0 : i32, i32
  }
  func.func @transform_4(%arg0: i32, %arg1: i32) -> (i32, i32) {
    %c0_i32 = arith.constant 0 : i32
    %c0_i32_0 = arith.constant 0 : i32
    %c0_i32_1 = arith.constant 0 : i32
    return %c0_i32, %c0_i32_0 : i32, i32
  }
  func.func @transform_5(%arg0: i32, %arg1: i32) -> (i32, i32, i32) {
    %c0_i32 = arith.constant 0 : i32
    %c0_i32_0 = arith.constant 0 : i32
    return %arg0, %arg1, %c0_i32 : i32, i32, i32
  }
}

</mosaic_0001>

<llo_original>
// kernel: dense_block_forward.2
$region0: #{dense_block_forward.2}
  #allocation0 [shape = 'u32[]', space=smem, size = 0x4, offset = 0x4, fixed_abs, tag = 'smem constant byte address 0x4 - core index']
  #allocation1 [shape = 'u32[72,128]{1,0:T(1,128)}', space=vmem, size = 0x9000, scoped, tag = 'internal scratch']
  %s0 = inlined_call_operand.vmem [shape: f32[2,2,10,18,128], index: 0, kind: input, shape index: {}]
  %s1 = inlined_call_operand.vmem [shape: f32[1,128], index: 1, kind: input, shape index: {}]
  %s2 = inlined_call_operand.vmem [shape: f32[1,128], index: 2, kind: input, shape index: {}]
  %s3 = inlined_call_operand.vmem [shape: bf16[1152,128], index: 3, kind: input, shape index: {}]
  %s4 = inlined_call_operand.vmem [shape: f32[1,128], index: 4, kind: input, shape index: {}]
  %s5 = inlined_call_operand.vmem [shape: f32[2,256,128], index: 5, kind: output, shape index: {}]
  %s6 = sld [smem:[#allocation0]]
  $region53: #{dense_block_forward.2} parent=0
    _
  %s8 = ssub.s32 1, %s6
  %s9 = scalar_select 0, %s8, %s6
  loop: start=0, step=1, limit=6
  $region2: #{dense_block_forward.2} parent=0 // loop_pre_header
    _
  $region3: #{dense_block_forward.2} parent=0 // loop_header
    %s11 = sphi 0, %s15
    %p12 = scmp.ge.s32.totalorder %s11, 6
    %s18 = sphi 0, %s30
    %s19 = sphi 0, %s26
    %s20 = sphi 0, %s18
    %s21 = sphi 0, %s19
    %s22 = sphi 0, %s20
    %s23 = sphi 0, %s21
    %s35 = sphi 0, %s37
    %s38 = sphi 0, %s35
    %s39 = sphi 0, %s38
    %s55 = sphi 0, %s39
    %s59 = sphi 0, %s59
    %s61 = sphi 0, %s59
    %s62 = sphi 0, %s61
    %s76 = sphi 0, %s62
    %s80 = sphi 0, %s80
    %s82 = sphi 0, %s80
    %s83 = sphi 0, %s82
    %s97 = sphi 0, %s83
    %s101 = sphi 0, %s101
    %s103 = sphi 0, %s101
    %s104 = sphi 0, %s103
    %s118 = sphi 0, %s104
    %s122 = sphi 0, %s122
    %s124 = sphi 0, %s122
    %s125 = sphi 0, %s124
    %s139 = sphi 0, %s125
    %s147 = sphi 0, %s149
    %s150 = sphi 0, %s147
    %s151 = sphi 0, %s150
    %s167 = sphi 0, %s151
  $region4: #{dense_block_forward.2} parent=0 // loop_header_branch
    %14 = sbr.rel (%p12) target = $region8
  $region5: #{dense_block_forward.2} parent=0 // loop_body
    %s16 = ssub.s32 %s11, 1
    %s17 = ssub.s32 %s11, 2
    %s24 = sadd.s32 1, %s19
    %p25 = scmp.ge.s32.totalorder %s24, 2
    %s26 = scalar_select %p25, 0, %s24
    %s27 = sadd.s32 1, %s18
    %s28 = scalar_select %p25, %s27, %s18
    %p29 = scmp.ge.s32.totalorder %s28, 2
    %s30 = scalar_select %p29, 0, %s28
    %s31 = ssub.s32 %s18, %s30
    %s32 = ssub.s32 %s19, %s26
    %s33 = sor.u32 %s31, %s32
    %p34 = scmp.eq.s32.totalorder %s33, 0
    %s36 = sadd.s32 %s35, 1
    %s37 = scalar_select %p34, %s35, %s36
    %p40 = pneg %p34
    %p41 = scmp.eq.s32.totalorder %s11, 3
    %p42 = por %p40, %p41
    %p43 = scmp.ne.s32.totalorder %s35, %s38
    %p44 = scmp.eq.s32.totalorder %s11, 0
    %p45 = por %p43, %p44
    %p46 = scmp.ne.s32.totalorder %s35, %s38
    %p47 = scmp.eq.s32.totalorder %s16, 3
    %p48 = por %p46, %p47
    %p49 = scmp.ne.s32.totalorder %s38, %s39
    %p50 = scmp.eq.s32.totalorder %s16, 0
    %p51 = por %p49, %p50
    %p52 = scmp.ne.s32.totalorder %s38, %s39
    %p53 = scmp.eq.s32.totalorder %s17, 3
    %p54 = por %p52, %p53
    %p56 = scmp.ne.s32.totalorder %s39, %s55
    %p57 = scmp.eq.s32.totalorder %s17, 0
    %p58 = por %p56, %p57
    %s60 = sadd.s32 %s59, 1
    %p63 = scmp.eq.s32.totalorder %s11, 3
    %p64 = scmp.ne.s32.totalorder %s59, %s61
    %p65 = scmp.eq.s32.totalorder %s11, 0
    %p66 = por %p64, %p65
    %p67 = scmp.ne.s32.totalorder %s59, %s61
    %p68 = scmp.eq.s32.totalorder %s16, 3
    %p69 = por %p67, %p68
    %p70 = scmp.ne.s32.totalorder %s61, %s62
    %p71 = scmp.eq.s32.totalorder %s16, 0
    %p72 = por %p70, %p71
    %p73 = scmp.ne.s32.totalorder %s61, %s62
    %p74 = scmp.eq.s32.totalorder %s17, 3
    %p75 = por %p73, %p74
    %p77 = scmp.ne.s32.totalorder %s62, %s76
    %p78 = scmp.eq.s32.totalorder %s17, 0
    %p79 = por %p77, %p78
    %s81 = sadd.s32 %s80, 1
    %p84 = scmp.eq.s32.totalorder %s11, 3
    %p85 = scmp.ne.s32.totalorder %s80, %s82
    %p86 = scmp.eq.s32.totalorder %s11, 0
    %p87 = por %p85, %p86
    %p88 = scmp.ne.s32.totalorder %s80, %s82
    %p89 = scmp.eq.s32.totalorder %s16, 3
    %p90 = por %p88, %p89
    %p91 = scmp.ne.s32.totalorder %s82, %s83
    %p92 = scmp.eq.s32.totalorder %s16, 0
    %p93 = por %p91, %p92
    %p94 = scmp.ne.s32.totalorder %s82, %s83
    %p95 = scmp.eq.s32.totalorder %s17, 3
    %p96 = por %p94, %p95
    %p98 = scmp.ne.s32.totalorder %s83, %s97
    %p99 = scmp.eq.s32.totalorder %s17, 0
    %p100 = por %p98, %p99
    %s102 = sadd.s32 %s101, 1
    %p105 = scmp.eq.s32.totalorder %s11, 3
    %p106 = scmp.ne.s32.totalorder %s101, %s103
    %p107 = scmp.eq.s32.totalorder %s11, 0
    %p108 = por %p106, %p107
    %p109 = scmp.ne.s32.totalorder %s101, %s103
    %p110 = scmp.eq.s32.totalorder %s16, 3
    %p111 = por %p109, %p110
    %p112 = scmp.ne.s32.totalorder %s103, %s104
    %p113 = scmp.eq.s32.totalorder %s16, 0
    %p114 = por %p112, %p113
    %p115 = scmp.ne.s32.totalorder %s103, %s104
    %p116 = scmp.eq.s32.totalorder %s17, 3
    %p117 = por %p115, %p116
    %p119 = scmp.ne.s32.totalorder %s104, %s118
    %p120 = scmp.eq.s32.totalorder %s17, 0
    %p121 = por %p119, %p120
    %s123 = sadd.s32 %s122, 1
    %p126 = scmp.eq.s32.totalorder %s11, 3
    %p127 = scmp.ne.s32.totalorder %s122, %s124
    %p128 = scmp.eq.s32.totalorder %s11, 0
    %p129 = por %p127, %p128
    %p130 = scmp.ne.s32.totalorder %s122, %s124
    %p131 = scmp.eq.s32.totalorder %s16, 3
    %p132 = por %p130, %p131
    %p133 = scmp.ne.s32.totalorder %s124, %s125
    %p134 = scmp.eq.s32.totalorder %s16, 0
    %p135 = por %p133, %p134
    %p136 = scmp.ne.s32.totalorder %s124, %s125
    %p137 = scmp.eq.s32.totalorder %s17, 3
    %p138 = por %p136, %p137
    %p140 = scmp.ne.s32.totalorder %s125, %s139
    %p141 = scmp.eq.s32.totalorder %s17, 0
    %p142 = por %p140, %p141
    %s143 = ssub.s32 %s18, %s30
    %s144 = ssub.s32 %s19, %s26
    %s145 = sor.u32 %s143, %s144
    %p146 = scmp.eq.s32.totalorder %s145, 0
    %s148 = sadd.s32 %s147, 1
    %s149 = scalar_select %p146, %s147, %s148
    %p152 = pneg %p146
    %p153 = scmp.eq.s32.totalorder %s11, 3
    %p154 = por %p152, %p153
    %p155 = scmp.ne.s32.totalorder %s147, %s150
    %p156 = scmp.eq.s32.totalorder %s11, 0
    %p157 = por %p155, %p156
    %p158 = scmp.ne.s32.totalorder %s147, %s150
    %p159 = scmp.eq.s32.totalorder %s16, 3
    %p160 = por %p158, %p159
    %p161 = scmp.ne.s32.totalorder %s150, %s151
    %p162 = scmp.eq.s32.totalorder %s16, 0
    %p163 = por %p161, %p162
    %p164 = scmp.ne.s32.totalorder %s150, %s151
    %p165 = scmp.eq.s32.totalorder %s17, 3
    %p166 = por %p164, %p165
    %p168 = scmp.ne.s32.totalorder %s151, %s167
    %p169 = scmp.eq.s32.totalorder %s17, 0
    %p170 = por %p168, %p169
    %p171 = scmp.le.s32.totalorder 1, %s11
    %p172 = scmp.lt.s32.totalorder %s11, 5
    %p173 = pnand %p171, %p172
    %p174 = pneg %p173
    // Predicated region
    $region9: #{dense_block_forward.2} parent=5 // pred_check
      _
    $region10: #{dense_block_forward.2} parent=5 // pred_check_branch
      %176 = sbr.rel (%p173) target = $region12
    $region11: #{dense_block_forward.2} parent=5 // pred_region
      %s177 = ssub.s32 %s11, 1
      // Predicated region
      $region13: #{dense_block_forward.2} parent=11 // pred_check
        %p178 = pneg %p72
      $region14: #{dense_block_forward.2} parent=11 // pred_check_branch
        %180 = sbr.rel (%p178) target = $region16
      $region15: #{dense_block_forward.2} parent=11 // pred_region
        _
      $region16: #{dense_block_forward.2} parent=11 // pred_fallthru
        _
      // Predicated region
      $region17: #{dense_block_forward.2} parent=11 // pred_check
        %p181 = pneg %p93
      $region18: #{dense_block_forward.2} parent=11 // pred_check_branch
        %183 = sbr.rel (%p181) target = $region20
      $region19: #{dense_block_forward.2} parent=11 // pred_region
        _
      $region20: #{dense_block_forward.2} parent=11 // pred_fallthru
        _
      // Predicated region
      $region21: #{dense_block_forward.2} parent=11 // pred_check
        %p184 = pneg %p114
      $region22: #{dense_block_forward.2} parent=11 // pred_check_branch
        %186 = sbr.rel (%p184) target = $region24
      $region23: #{dense_block_forward.2} parent=11 // pred_region
        _
      $region24: #{dense_block_forward.2} parent=11 // pred_fallthru
        _
      // Predicated region
      $region25: #{dense_block_forward.2} parent=11 // pred_check
        %p187 = pneg %p135
      $region26: #{dense_block_forward.2} parent=11 // pred_check_branch
        %189 = sbr.rel (%p187) target = $region28
      $region27: #{dense_block_forward.2} parent=11 // pred_region
        _
      $region28: #{dense_block_forward.2} parent=11 // pred_fallthru
        _
    $region12: #{dense_block_forward.2} parent=5 // pred_fallthru
      _
    %p190 = scmp.lt.s32.totalorder %s11, 4
    // Predicated region
    $region29: #{dense_block_forward.2} parent=5 // pred_check
      %p191 = pneg %p190
    $region30: #{dense_block_forward.2} parent=5 // pred_check_branch
      %193 = sbr.rel (%p191) target = $region32
    $region31: #{dense_block_forward.2} parent=5 // pred_region
      // Predicated region
      $region33: #{dense_block_forward.2} parent=31 // pred_check
        %p194 = pneg %p45
      $region34: #{dense_block_forward.2} parent=31 // pred_check_branch
        %196 = sbr.rel (%p194) target = $region36
      $region35: #{dense_block_forward.2} parent=31 // pred_region
        %p197 = scmp.lt.s32.totalorder %s18, 1
        %s198 = scalar_select %p197, %s18, 1
        %p199 = scmp.lt.s32.totalorder %s19, 1
        %s200 = scalar_select %p199, %s19, 1
        %s201 = smul.addr %s200, 30
        %s202 = smul.addr %s198, 60
        %s203 = sadd.s32 %s201, %s202
        %s204 = smul.addr %s203, 8
        %s205 = scalar_lea.vmem %s0, %s204
      $region36: #{dense_block_forward.2} parent=31 // pred_fallthru
        _
    $region32: #{dense_block_forward.2} parent=5 // pred_fallthru
      _
    %p206 = scmp.le.s32.totalorder 1, %s11
    %p207 = scmp.lt.s32.totalorder %s11, 5
    %p208 = pnand %p206, %p207
    %p209 = pneg %p208
    // Predicated region
    $region37: #{dense_block_forward.2} parent=5 // pred_check
      _
    $region38: #{dense_block_forward.2} parent=5 // pred_check_branch
      %211 = sbr.rel (%p208) target = $region40
    $region39: #{dense_block_forward.2} parent=5 // pred_region
      %s212 = ssub.s32 %s11, 1
      %p213 = scmp.lt.s32.totalorder %s20, 1
      %s214 = scalar_select %p213, %s20, 1
      %p215 = scmp.lt.s32.totalorder %s21, 1
      %s216 = scalar_select %p215, %s21, 1
      %s217 = smul.addr %s216, 30
      %s218 = smul.addr %s214, 60
      %s219 = sadd.s32 %s217, %s218
      %s220 = smul.addr %s219, 8
      %s221 = scalar_lea.vmem %s0, %s220
      %p222 = pneg %p51
      %p223 = pneg %p48
      %p224 = pneg %p72
      %p225 = pneg %p69
      %p226 = pneg %p93
      %p227 = pneg %p90
      %p228 = pneg %p114
      %p229 = pneg %p111
      %p230 = pneg %p135
      %p231 = pneg %p132
      %p232 = pneg %p163
      %p233 = pneg %p160
      %s234 = smul.u32 16, %s21
      %p235 = scmp.lt.s32.totalorder %s20, 1
      %s236 = scalar_select %p235, %s20, 1
      %p237 = scmp.lt.s32.totalorder %s234, 31
      %s238 = scalar_select %p237, %s234, 31
      %s239 = smul.addr %s236, 32
      %s240 = sadd.s32 %s238, %s239
      %s241 = smul.addr %s240, 8
      %s242 = scalar_lea.vmem %s5, %s241
      %p243 = scmp.lt.s32.totalorder %s20, 1
      %s244 = scalar_select %p243, %s20, 1
      %p245 = scmp.lt.s32.totalorder %s21, 1
      %s246 = scalar_select %p245, %s21, 1
      %s247 = smul.addr %s246, 30
      %s248 = smul.addr %s244, 60
      %s249 = sadd.s32 %s247, %s248
      %s250 = smul.addr %s249, 8
      %s251 = scalar_lea.vmem %s0, %s250
      %s252 = smul.u32 16, %s21
      %p253 = scmp.lt.s32.totalorder %s20, 1
      %s254 = scalar_select %p253, %s20, 1
      %p255 = scmp.lt.s32.totalorder %s252, 31
      %s256 = scalar_select %p255, %s252, 31
      %s257 = smul.addr %s254, 32
      %s258 = sadd.s32 %s256, %s257
      %s259 = smul.addr %s258, 8
      %s260 = scalar_lea.vmem %s5, %s259
      %s261 = smul.u32 16, %s21
      %v262 = vld [vmem:[%s251] sm:$0xff]
      %v263 = vld [vmem:[%s251 + $0x8] sm:$0xff]
      %v264 = vld [vmem:[%s251 + $0x10] sm:$0x3]
      %v265 = vld [vmem:[%s251 + $0x18] sm:$0xff]
      %v266 = vld [vmem:[%s251 + $0x20] sm:$0xff]
      %v267 = vld [vmem:[%s251 + $0x28] sm:$0x3]
      %v268 = vld [vmem:[%s251 + $0x30] sm:$0xff]
      %v269 = vld [vmem:[%s251 + $0x38] sm:$0xff]
      %v270 = vld [vmem:[%s251 + $0x40] sm:$0x3]
      %v271 = vld [vmem:[%s251 + $0x48] sm:$0xff]
      %v272 = vld [vmem:[%s251 + $0x50] sm:$0xff]
      %v273 = vld [vmem:[%s251 + $0x58] sm:$0x3]
      %v274 = vld [vmem:[%s251 + $0x60] sm:$0xff]
      %v275 = vld [vmem:[%s251 + $0x68] sm:$0xff]
      %v276 = vld [vmem:[%s251 + $0x70] sm:$0x3]
      %v277 = vld [vmem:[%s251 + $0x78] sm:$0xff]
      %v278 = vld [vmem:[%s251 + $0x80] sm:$0xff]
      %v279 = vld [vmem:[%s251 + $0x88] sm:$0x3]
      %v280 = vld [vmem:[%s251 + $0x90] sm:$0xff]
      %v281 = vld [vmem:[%s251 + $0x98] sm:$0xff]
      %v282 = vld [vmem:[%s251 + $0xa0] sm:$0x3]
      %v283 = vld [vmem:[%s251 + $0xa8] sm:$0xff]
      %v284 = vld [vmem:[%s251 + $0xb0] sm:$0xff]
      %v285 = vld [vmem:[%s251 + $0xb8] sm:$0x3]
      %v286 = vld [vmem:[%s251 + $0xc0] sm:$0xff]
      %v287 = vld [vmem:[%s251 + $0xc8] sm:$0xff]
      %v288 = vld [vmem:[%s251 + $0xd0] sm:$0x3]
      %v289 = vld [vmem:[%s251 + $0xd8] sm:$0xff]
      %v290 = vld [vmem:[%s251 + $0xe0] sm:$0xff]
      %v291 = vld [vmem:[%s251 + $0xe8] sm:$0x3]
      %v292 = vld [vmem:[%s1] sm:$0x1]
      %v294 = vperm.slane %v292, 0
      %v296 = vmul.f32 %v262, %v294
      %v297 = vmul.f32 %v263, %v294
      %v298 = vmul.f32 %v264, %v294
      %v299 = vmul.f32 %v265, %v294
      %v300 = vmul.f32 %v266, %v294
      %v301 = vmul.f32 %v267, %v294
      %v302 = vmul.f32 %v268, %v294
      %v303 = vmul.f32 %v269, %v294
      %v304 = vmul.f32 %v270, %v294
      %v305 = vmul.f32 %v271, %v294
      %v306 = vmul.f32 %v272, %v294
      %v307 = vmul.f32 %v273, %v294
      %v308 = vmul.f32 %v274, %v294
      %v309 = vmul.f32 %v275, %v294
      %v310 = vmul.f32 %v276, %v294
      %v311 = vmul.f32 %v277, %v294
      %v312 = vmul.f32 %v278, %v294
      %v313 = vmul.f32 %v279, %v294
      %v314 = vmul.f32 %v280, %v294
      %v315 = vmul.f32 %v281, %v294
      %v316 = vmul.f32 %v282, %v294
      %v317 = vmul.f32 %v283, %v294
      %v318 = vmul.f32 %v284, %v294
      %v319 = vmul.f32 %v285, %v294
      %v320 = vmul.f32 %v286, %v294
      %v321 = vmul.f32 %v287, %v294
      %v322 = vmul.f32 %v288, %v294
      %v323 = vmul.f32 %v289, %v294
      %v324 = vmul.f32 %v290, %v294
      %v325 = vmul.f32 %v291, %v294
      %v326 = vld [vmem:[%s2] sm:$0x1]
      %v328 = vperm.slane %v326, 0
      %v330 = vadd.f32 %v296, %v328
      %v331 = vadd.f32 %v297, %v328
      %v332 = vadd.f32 %v298, %v328
      %v333 = vadd.f32 %v299, %v328
      %v334 = vadd.f32 %v300, %v328
      %v335 = vadd.f32 %v301, %v328
      %v336 = vadd.f32 %v302, %v328
      %v337 = vadd.f32 %v303, %v328
      %v338 = vadd.f32 %v304, %v328
      %v339 = vadd.f32 %v305, %v328
      %v340 = vadd.f32 %v306, %v328
      %v341 = vadd.f32 %v307, %v328
      %v342 = vadd.f32 %v308, %v328
      %v343 = vadd.f32 %v309, %v328
      %v344 = vadd.f32 %v310, %v328
      %v345 = vadd.f32 %v311, %v328
      %v346 = vadd.f32 %v312, %v328
      %v347 = vadd.f32 %v313, %v328
      %v348 = vadd.f32 %v314, %v328
      %v349 = vadd.f32 %v315, %v328
      %v350 = vadd.f32 %v316, %v328
      %v351 = vadd.f32 %v317, %v328
      %v352 = vadd.f32 %v318, %v328
      %v353 = vadd.f32 %v319, %v328
      %v354 = vadd.f32 %v320, %v328
      %v355 = vadd.f32 %v321, %v328
      %v356 = vadd.f32 %v322, %v328
      %v357 = vadd.f32 %v323, %v328
      %v358 = vadd.f32 %v324, %v328
      %v359 = vadd.f32 %v325, %v328
      %v360 = vmax.f32 %v330, 0.0
      %v361 = vmax.f32 %v331, 0.0
      %v362 = vmax.f32 %v332, 0.0
      %v363 = vmax.f32 %v333, 0.0
      %v364 = vmax.f32 %v334, 0.0
      %v365 = vmax.f32 %v335, 0.0
      %v366 = vmax.f32 %v336, 0.0
      %v367 = vmax.f32 %v337, 0.0
      %v368 = vmax.f32 %v338, 0.0
      %v369 = vmax.f32 %v339, 0.0
      %v370 = vmax.f32 %v340, 0.0
      %v371 = vmax.f32 %v341, 0.0
      %v372 = vmax.f32 %v342, 0.0
      %v373 = vmax.f32 %v343, 0.0
      %v374 = vmax.f32 %v344, 0.0
      %v375 = vmax.f32 %v345, 0.0
      %v376 = vmax.f32 %v346, 0.0
      %v377 = vmax.f32 %v347, 0.0
      %v378 = vmax.f32 %v348, 0.0
      %v379 = vmax.f32 %v349, 0.0
      %v380 = vmax.f32 %v350, 0.0
      %v381 = vmax.f32 %v351, 0.0
      %v382 = vmax.f32 %v352, 0.0
      %v383 = vmax.f32 %v353, 0.0
      %v384 = vmax.f32 %v354, 0.0
      %v385 = vmax.f32 %v355, 0.0
      %v386 = vmax.f32 %v356, 0.0
      %v387 = vmax.f32 %v357, 0.0
      %v388 = vmax.f32 %v358, 0.0
      %v389 = vmax.f32 %v359, 0.0
      %p390 = scmp.le.s32.totalorder %s21, 0
      %s391 = scalar_select %p390, 1, 0
      %p392 = scmp.lt.s32.totalorder %s21, 1
      %s393 = scalar_select %p392, 9, 8
      %v394 = vlaneseq
      %v395 = vshrl.u32 %v394, 7
      %v396 = vadd.s32 %v395, 8
      %v397 = vadd.s32 %v395, 16
      %v398 = vstv %s391
      %vm399 = vcmp.le.s32.totalorder %v398, 0
      %vm400 = vcmp.le.s32.totalorder %v398, 1
      %vm401 = vcmp.le.s32.totalorder %v398, 2
      %vm402 = vcmp.le.s32.totalorder %v398, 3
      %vm403 = vcmp.le.s32.totalorder %v398, 4
      %vm404 = vcmp.le.s32.totalorder %v398, 5
      %vm405 = vcmp.le.s32.totalorder %v398, 6
      %vm406 = vcmp.le.s32.totalorder %v398, 7
      %vm407 = vcmp.le.s32.totalorder %v398, 8
      %vm408 = vcmp.le.s32.totalorder %v398, 9
      %v409 = vstv %s393
      %vm410 = vcmp.ge.s32.totalorder %v409, 0
      %vm411 = vcmp.ge.s32.totalorder %v409, 1
      %vm412 = vcmp.ge.s32.totalorder %v409, 2
      %vm413 = vcmp.ge.s32.totalorder %v409, 3
      %vm414 = vcmp.ge.s32.totalorder %v409, 4
      %vm415 = vcmp.ge.s32.totalorder %v409, 5
      %vm416 = vcmp.ge.s32.totalorder %v409, 6
      %vm417 = vcmp.ge.s32.totalorder %v409, 7
      %vm418 = vcmp.ge.s32.totalorder %v409, 8
      %vm419 = vcmp.ge.s32.totalorder %v409, 9
      %vm420 = vmand %vm399, %vm410
      %vm421 = vmand %vm400, %vm411
      %vm422 = vmand %vm401, %vm412
      %vm423 = vmand %vm402, %vm413
      %vm424 = vmand %vm403, %vm414
      %vm425 = vmand %vm404, %vm415
      %vm426 = vmand %vm405, %vm416
      %vm427 = vmand %vm406, %vm417
      %vm428 = vmand %vm407, %vm418
      %vm429 = vmand %vm408, %vm419
      %vm430 = vcmp.ge.s32.totalorder %v395, 1
      %vm431 = vcmp.ge.s32.totalorder %v396, 1
      %vm432 = vcmp.ge.s32.totalorder %v397, 1
      %vm433 = vmand %vm420, %vm430
      %vm434 = vmand %vm420, %vm431
      %vm435 = vmand %vm420, %vm432
      %vm436 = vmand %vm421, %vm430
      %vm437 = vmand %vm421, %vm431
      %vm438 = vmand %vm421, %vm432
      %vm439 = vmand %vm422, %vm430
      %vm440 = vmand %vm422, %vm431
      %vm441 = vmand %vm422, %vm432
      %vm442 = vmand %vm423, %vm430
      %vm443 = vmand %vm423, %vm431
      %vm444 = vmand %vm423, %vm432
      %vm445 = vmand %vm424, %vm430
      %vm446 = vmand %vm424, %vm431
      %vm447 = vmand %vm424, %vm432
      %vm448 = vmand %vm425, %vm430
      %vm449 = vmand %vm425, %vm431
      %vm450 = vmand %vm425, %vm432
      %vm451 = vmand %vm426, %vm430
      %vm452 = vmand %vm426, %vm431
      %vm453 = vmand %vm426, %vm432
      %vm454 = vmand %vm427, %vm430
      %vm455 = vmand %vm427, %vm431
      %vm456 = vmand %vm427, %vm432
      %vm457 = vmand %vm428, %vm430
      %vm458 = vmand %vm428, %vm431
      %vm459 = vmand %vm428, %vm432
      %vm460 = vmand %vm429, %vm430
      %vm461 = vmand %vm429, %vm431
      %vm462 = vmand %vm429, %vm432
      %vm463 = vcmp.le.s32.totalorder %v395, 16
      %vm464 = vcmp.le.s32.totalorder %v396, 16
      %vm465 = vcmp.le.s32.totalorder %v397, 16
      %vm466 = vmand %vm433, %vm463
      %vm467 = vmand %vm434, %vm464
      %vm468 = vmand %vm435, %vm465
      %vm469 = vmand %vm436, %vm463
      %vm470 = vmand %vm437, %vm464
      %vm471 = vmand %vm438, %vm465
      %vm472 = vmand %vm439, %vm463
      %vm473 = vmand %vm440, %vm464
      %vm474 = vmand %vm441, %vm465
      %vm475 = vmand %vm442, %vm463
      %vm476 = vmand %vm443, %vm464
      %vm477 = vmand %vm444, %vm465
      %vm478 = vmand %vm445, %vm463
      %vm479 = vmand %vm446, %vm464
      %vm480 = vmand %vm447, %vm465
      %vm481 = vmand %vm448, %vm463
      %vm482 = vmand %vm449, %vm464
      %vm483 = vmand %vm450, %vm465
      %vm484 = vmand %vm451, %vm463
      %vm485 = vmand %vm452, %vm464
      %vm486 = vmand %vm453, %vm465
      %vm487 = vmand %vm454, %vm463
      %vm488 = vmand %vm455, %vm464
      %vm489 = vmand %vm456, %vm465
      %vm490 = vmand %vm457, %vm463
      %vm491 = vmand %vm458, %vm464
      %vm492 = vmand %vm459, %vm465
      %vm493 = vmand %vm460, %vm463
      %vm494 = vmand %vm461, %vm464
      %vm495 = vmand %vm462, %vm465
      %v496 = vsel %vm466, 1, 0
      %v497 = vsel %vm467, 1, 0
      %v498 = vsel %vm468, 1, 0
      %v499 = vsel %vm469, 1, 0
      %v500 = vsel %vm470, 1, 0
      %v501 = vsel %vm471, 1, 0
      %v502 = vsel %vm472, 1, 0
      %v503 = vsel %vm473, 1, 0
      %v504 = vsel %vm474, 1, 0
      %v505 = vsel %vm475, 1, 0
      %v506 = vsel %vm476, 1, 0
      %v507 = vsel %vm477, 1, 0
      %v508 = vsel %vm478, 1, 0
      %v509 = vsel %vm479, 1, 0
      %v510 = vsel %vm480, 1, 0
      %v511 = vsel %vm481, 1, 0
      %v512 = vsel %vm482, 1, 0
      %v513 = vsel %vm483, 1, 0
      %v514 = vsel %vm484, 1, 0
      %v515 = vsel %vm485, 1, 0
      %v516 = vsel %vm486, 1, 0
      %v517 = vsel %vm487, 1, 0
      %v518 = vsel %vm488, 1, 0
      %v519 = vsel %vm489, 1, 0
      %v520 = vsel %vm490, 1, 0
      %v521 = vsel %vm491, 1, 0
      %v522 = vsel %vm492, 1, 0
      %v523 = vsel %vm493, 1, 0
      %v524 = vsel %vm494, 1, 0
      %v525 = vsel %vm495, 1, 0
      %vm526 = vcmp.eq.s32.totalorder %v496, 1
      %vm527 = vcmp.eq.s32.totalorder %v497, 1
      %vm528 = vcmp.eq.s32.totalorder %v498, 1
      %vm529 = vcmp.eq.s32.totalorder %v499, 1
      %vm530 = vcmp.eq.s32.totalorder %v500, 1
      %vm531 = vcmp.eq.s32.totalorder %v501, 1
      %vm532 = vcmp.eq.s32.totalorder %v502, 1
      %vm533 = vcmp.eq.s32.totalorder %v503, 1
      %vm534 = vcmp.eq.s32.totalorder %v504, 1
      %vm535 = vcmp.eq.s32.totalorder %v505, 1
      %vm536 = vcmp.eq.s32.totalorder %v506, 1
      %vm537 = vcmp.eq.s32.totalorder %v507, 1
      %vm538 = vcmp.eq.s32.totalorder %v508, 1
      %vm539 = vcmp.eq.s32.totalorder %v509, 1
      %vm540 = vcmp.eq.s32.totalorder %v510, 1
      %vm541 = vcmp.eq.s32.totalorder %v511, 1
      %vm542 = vcmp.eq.s32.totalorder %v512, 1
      %vm543 = vcmp.eq.s32.totalorder %v513, 1
      %vm544 = vcmp.eq.s32.totalorder %v514, 1
      %vm545 = vcmp.eq.s32.totalorder %v515, 1
      %vm546 = vcmp.eq.s32.totalorder %v516, 1
      %vm547 = vcmp.eq.s32.totalorder %v517, 1
      %vm548 = vcmp.eq.s32.totalorder %v518, 1
      %vm549 = vcmp.eq.s32.totalorder %v519, 1
      %vm550 = vcmp.eq.s32.totalorder %v520, 1
      %vm551 = vcmp.eq.s32.totalorder %v521, 1
      %vm552 = vcmp.eq.s32.totalorder %v522, 1
      %vm553 = vcmp.eq.s32.totalorder %v523, 1
      %vm554 = vcmp.eq.s32.totalorder %v524, 1
      %vm555 = vcmp.eq.s32.totalorder %v525, 1
      %v556 = vsel %vm526, %v360, 0.0
      %v557 = vsel %vm527, %v361, 0.0
      %v558 = vsel %vm528, %v362, 0.0
      %v559 = vsel %vm529, %v363, 0.0
      %v560 = vsel %vm530, %v364, 0.0
      %v561 = vsel %vm531, %v365, 0.0
      %v562 = vsel %vm532, %v366, 0.0
      %v563 = vsel %vm533, %v367, 0.0
      %v564 = vsel %vm534, %v368, 0.0
      %v565 = vsel %vm535, %v369, 0.0
      %v566 = vsel %vm536, %v370, 0.0
      %v567 = vsel %vm537, %v371, 0.0
      %v568 = vsel %vm538, %v372, 0.0
      %v569 = vsel %vm539, %v373, 0.0
      %v570 = vsel %vm540, %v374, 0.0
      %v571 = vsel %vm541, %v375, 0.0
      %v572 = vsel %vm542, %v376, 0.0
      %v573 = vsel %vm543, %v377, 0.0
      %v574 = vsel %vm544, %v378, 0.0
      %v575 = vsel %vm545, %v379, 0.0
      %v576 = vsel %vm546, %v380, 0.0
      %v577 = vsel %vm547, %v381, 0.0
      %v578 = vsel %vm548, %v382, 0.0
      %v579 = vsel %vm549, %v383, 0.0
      %v580 = vsel %vm550, %v384, 0.0
      %v581 = vsel %vm551, %v385, 0.0
      %v582 = vsel %vm552, %v386, 0.0
      %v583 = vsel %vm553, %v387, 0.0
      %v584 = vsel %vm554, %v388, 0.0
      %v585 = vsel %vm555, %v389, 0.0
      %v586 = vpack.c.bf16 %v556, %v556
      %v587 = vpack.c.bf16 %v557, %v557
      %v588 = vpack.c.bf16 %v558, %v558
      %v589 = vpack.c.bf16 %v559, %v559
      %v590 = vpack.c.bf16 %v560, %v560
      %v591 = vpack.c.bf16 %v561, %v561
      %v592 = vpack.c.bf16 %v562, %v562
      %v593 = vpack.c.bf16 %v563, %v563
      %v594 = vpack.c.bf16 %v564, %v564
      %v595 = vpack.c.bf16 %v565, %v565
      %v596 = vpack.c.bf16 %v566, %v566
      %v597 = vpack.c.bf16 %v567, %v567
      %v598 = vpack.c.bf16 %v568, %v568
      %v599 = vpack.c.bf16 %v569, %v569
      %v600 = vpack.c.bf16 %v570, %v570
      %v601 = vpack.c.bf16 %v571, %v571
      %v602 = vpack.c.bf16 %v572, %v572
      %v603 = vpack.c.bf16 %v573, %v573
      %v604 = vpack.c.bf16 %v574, %v574
      %v605 = vpack.c.bf16 %v575, %v575
      %v606 = vpack.c.bf16 %v576, %v576
      %v607 = vpack.c.bf16 %v577, %v577
      %v608 = vpack.c.bf16 %v578, %v578
      %v609 = vpack.c.bf16 %v579, %v579
      %v610 = vpack.c.bf16 %v580, %v580
      %v611 = vpack.c.bf16 %v581, %v581
      %v612 = vpack.c.bf16 %v582, %v582
      %v613 = vpack.c.bf16 %v583, %v583
      %v614 = vpack.c.bf16 %v584, %v584
      %v615 = vpack.c.bf16 %v585, %v585
      %v632 = vunpack.c.l.b16 %v586
      %v633 = vunpack.c.l.b16 %v587
      %v634 = vunpack.c.l.b16 %v589
      %v635 = vunpack.c.l.b16 %v590
      %v636 = vunpack.c.l.b16 %v592
      %v637 = vunpack.c.l.b16 %v593
      %v638 = vunpack.c.l.b16 %v595
      %v639 = vunpack.c.l.b16 %v596
      %v640 = vunpack.c.l.b16 %v598
      %v641 = vunpack.c.l.b16 %v599
      %v642 = vunpack.c.l.b16 %v601
      %v643 = vunpack.c.l.b16 %v602
      %v644 = vunpack.c.l.b16 %v604
      %v645 = vunpack.c.l.b16 %v605
      %v646 = vunpack.c.l.b16 %v607
      %v647 = vunpack.c.l.b16 %v608
      %v648 = vpack.c.b16 %v633, %v632
      %v649 = vpack.c.b16 %v635, %v634
      %v650 = vpack.c.b16 %v637, %v636
      %v651 = vpack.c.b16 %v639, %v638
      %v652 = vpack.c.b16 %v641, %v640
      %v653 = vpack.c.b16 %v643, %v642
      %v654 = vpack.c.b16 %v645, %v644
      %v655 = vpack.c.b16 %v647, %v646
      %v672 = vunpack.c.l.b16 %v588
      %v673 = vunpack.c.l.b16 %v591
      %v674 = vunpack.c.l.b16 %v594
      %v675 = vunpack.c.l.b16 %v597
      %v676 = vunpack.c.l.b16 %v600
      %v677 = vunpack.c.l.b16 %v603
      %v678 = vunpack.c.l.b16 %v606
      %v679 = vunpack.c.l.b16 %v609
      %v680 = vpack.c.b16 %v672, %v672
      %v681 = vpack.c.b16 %v673, %v673
      %v682 = vpack.c.b16 %v674, %v674
      %v683 = vpack.c.b16 %v675, %v675
      %v684 = vpack.c.b16 %v676, %v676
      %v685 = vpack.c.b16 %v677, %v677
      %v686 = vpack.c.b16 %v678, %v678
      %v687 = vpack.c.b16 %v679, %v679
      %vm688 = vsmask.f32 7424
      %v690 = vshrl.u32 %v648, 16
      %v692 = vshll.u32 %v648, 16
      %v694 = vrot.slane %v692, 1
      %v695 = vor.u32 %v690, %v694
      %v697 = vshll.u32 %v680, 16
      %v699 = vrot.slane %v697, 1
      %v700 = vsel %vm688, %v695, %v699
      %v702 = vshrl.u32 %v649, 16
      %v704 = vshll.u32 %v649, 16
      %v706 = vrot.slane %v704, 1
      %v707 = vor.u32 %v702, %v706
      %v709 = vshll.u32 %v681, 16
      %v711 = vrot.slane %v709, 1
      %v712 = vsel %vm688, %v707, %v711
      %v714 = vshrl.u32 %v650, 16
      %v716 = vshll.u32 %v650, 16
      %v718 = vrot.slane %v716, 1
      %v719 = vor.u32 %v714, %v718
      %v721 = vshll.u32 %v682, 16
      %v723 = vrot.slane %v721, 1
      %v724 = vsel %vm688, %v719, %v723
      %v726 = vshrl.u32 %v651, 16
      %v728 = vshll.u32 %v651, 16
      %v730 = vrot.slane %v728, 1
      %v731 = vor.u32 %v726, %v730
      %v733 = vshll.u32 %v683, 16
      %v735 = vrot.slane %v733, 1
      %v736 = vsel %vm688, %v731, %v735
      %v738 = vshrl.u32 %v652, 16
      %v740 = vshll.u32 %v652, 16
      %v742 = vrot.slane %v740, 1
      %v743 = vor.u32 %v738, %v742
      %v745 = vshll.u32 %v684, 16
      %v747 = vrot.slane %v745, 1
      %v748 = vsel %vm688, %v743, %v747
      %v750 = vshrl.u32 %v653, 16
      %v752 = vshll.u32 %v653, 16
      %v754 = vrot.slane %v752, 1
      %v755 = vor.u32 %v750, %v754
      %v757 = vshll.u32 %v685, 16
      %v759 = vrot.slane %v757, 1
      %v760 = vsel %vm688, %v755, %v759
      %v762 = vshrl.u32 %v654, 16
      %v764 = vshll.u32 %v654, 16
      %v766 = vrot.slane %v764, 1
      %v767 = vor.u32 %v762, %v766
      %v769 = vshll.u32 %v686, 16
      %v771 = vrot.slane %v769, 1
      %v772 = vsel %vm688, %v767, %v771
      %v774 = vshrl.u32 %v655, 16
      %v776 = vshll.u32 %v655, 16
      %v778 = vrot.slane %v776, 1
      %v779 = vor.u32 %v774, %v778
      %v781 = vshll.u32 %v687, 16
      %v783 = vrot.slane %v781, 1
      %v784 = vsel %vm688, %v779, %v783
      %vm793 = vcmask 1046528
      %v794 = vrot.slane %v648, 1
      %v795 = vrot.slane %v680, 1
      %v796 = vsel %vm793, %v794, %v795
      %v797 = vrot.slane %v649, 1
      %v798 = vrot.slane %v681, 1
      %v799 = vsel %vm793, %v797, %v798
      %v800 = vrot.slane %v650, 1
      %v801 = vrot.slane %v682, 1
      %v802 = vsel %vm793, %v800, %v801
      %v803 = vrot.slane %v651, 1
      %v804 = vrot.slane %v683, 1
      %v805 = vsel %vm793, %v803, %v804
      %v806 = vrot.slane %v652, 1
      %v807 = vrot.slane %v684, 1
      %v808 = vsel %vm793, %v806, %v807
      %v809 = vrot.slane %v653, 1
      %v810 = vrot.slane %v685, 1
      %v811 = vsel %vm793, %v809, %v810
      %v812 = vrot.slane %v654, 1
      %v813 = vrot.slane %v686, 1
      %v814 = vsel %vm793, %v812, %v813
      %v815 = vrot.slane %v655, 1
      %v816 = vrot.slane %v687, 1
      %v817 = vsel %vm793, %v815, %v816
      %v828 = vunpack.c.l.b16 %v610
      %v829 = vunpack.c.l.b16 %v611
      %v830 = vpack.c.b16 %v829, %v828
      %v833 = vunpack.c.l.b16 %v612
      %v834 = vpack.c.b16 %v833, %v833
      %v836 = vshrl.u32 %v830, 16
      %v838 = vshll.u32 %v830, 16
      %v840 = vrot.slane %v838, 1
      %v841 = vor.u32 %v836, %v840
      %v843 = vshll.u32 %v834, 16
      %v845 = vrot.slane %v843, 1
      %v846 = vsel %vm688, %v841, %v845
      %v848 = vrot.slane %v830, 1
      %v849 = vrot.slane %v834, 1
      %v850 = vsel %vm793, %v848, %v849
      %v854 = vunpack.c.l.b16 %v613
      %v855 = vunpack.c.l.b16 %v614
      %v856 = vpack.c.b16 %v855, %v854
      %v859 = vunpack.c.l.b16 %v615
      %v860 = vpack.c.b16 %v859, %v859
      %v862 = vshrl.u32 %v856, 16
      %v864 = vshll.u32 %v856, 16
      %v866 = vrot.slane %v864, 1
      %v867 = vor.u32 %v862, %v866
      %v869 = vshll.u32 %v860, 16
      %v871 = vrot.slane %v869, 1
      %v872 = vsel %vm688, %v867, %v871
      %v874 = vrot.slane %v856, 1
      %v875 = vrot.slane %v860, 1
      %v876 = vsel %vm793, %v874, %v875
      %v878 = vld [vmem:[%s3] sm:$0xf]
      %v879 = vld [vmem:[%s3 + $0x4] sm:$0xf]
      %v880 = vld [vmem:[%s3 + $0x8] sm:$0xf]
      %v881 = vld [vmem:[%s3 + $0xc] sm:$0xf]
      %v882 = vld [vmem:[%s3 + $0x10] sm:$0xf]
      %v883 = vld [vmem:[%s3 + $0x14] sm:$0xf]
      %v884 = vld [vmem:[%s3 + $0x18] sm:$0xf]
      %v885 = vld [vmem:[%s3 + $0x1c] sm:$0xf]
      %v886 = vld [vmem:[%s3 + $0x20] sm:$0xf]
      %v887 = vld [vmem:[%s3 + $0x24] sm:$0xf]
      %v888 = vld [vmem:[%s3 + $0x28] sm:$0xf]
      %v889 = vld [vmem:[%s3 + $0x2c] sm:$0xf]
      %v890 = vld [vmem:[%s3 + $0x30] sm:$0xf]
      %v891 = vld [vmem:[%s3 + $0x34] sm:$0xf]
      %v892 = vld [vmem:[%s3 + $0x38] sm:$0xf]
      %v893 = vld [vmem:[%s3 + $0x3c] sm:$0xf]
      %v894 = vld [vmem:[%s3 + $0x40] sm:$0xf]
      %v895 = vld [vmem:[%s3 + $0x44] sm:$0xf]
      %v896 = vld [vmem:[%s3 + $0x48] sm:$0xf]
      %v897 = vld [vmem:[%s3 + $0x4c] sm:$0xf]
      %v898 = vld [vmem:[%s3 + $0x50] sm:$0xf]
      %v899 = vld [vmem:[%s3 + $0x54] sm:$0xf]
      %v900 = vld [vmem:[%s3 + $0x58] sm:$0xf]
      %v901 = vld [vmem:[%s3 + $0x5c] sm:$0xf]
      %v902 = vld [vmem:[%s3 + $0x60] sm:$0xf]
      %v903 = vld [vmem:[%s3 + $0x64] sm:$0xf]
      %v904 = vld [vmem:[%s3 + $0x68] sm:$0xf]
      %v905 = vld [vmem:[%s3 + $0x6c] sm:$0xf]
      %v906 = vld [vmem:[%s3 + $0x70] sm:$0xf]
      %v907 = vld [vmem:[%s3 + $0x74] sm:$0xf]
      %v908 = vld [vmem:[%s3 + $0x78] sm:$0xf]
      %v909 = vld [vmem:[%s3 + $0x7c] sm:$0xf]
      %v910 = vld [vmem:[%s3 + $0x80] sm:$0xf]
      %v911 = vld [vmem:[%s3 + $0x84] sm:$0xf]
      %v912 = vld [vmem:[%s3 + $0x88] sm:$0xf]
      %v913 = vld [vmem:[%s3 + $0x8c] sm:$0xf]
      %v914 = vld [vmem:[%s3 + $0x90] sm:$0xf]
      %v915 = vld [vmem:[%s3 + $0x94] sm:$0xf]
      %v916 = vld [vmem:[%s3 + $0x98] sm:$0xf]
      %v917 = vld [vmem:[%s3 + $0x9c] sm:$0xf]
      %v918 = vld [vmem:[%s3 + $0xa0] sm:$0xf]
      %v919 = vld [vmem:[%s3 + $0xa4] sm:$0xf]
      %v920 = vld [vmem:[%s3 + $0xa8] sm:$0xf]
      %v921 = vld [vmem:[%s3 + $0xac] sm:$0xf]
      %v922 = vld [vmem:[%s3 + $0xb0] sm:$0xf]
      %v923 = vld [vmem:[%s3 + $0xb4] sm:$0xf]
      %v924 = vld [vmem:[%s3 + $0xb8] sm:$0xf]
      %v925 = vld [vmem:[%s3 + $0xbc] sm:$0xf]
      %v926 = vld [vmem:[%s3 + $0xc0] sm:$0xf]
      %v927 = vld [vmem:[%s3 + $0xc4] sm:$0xf]
      %v928 = vld [vmem:[%s3 + $0xc8] sm:$0xf]
      %v929 = vld [vmem:[%s3 + $0xcc] sm:$0xf]
      %v930 = vld [vmem:[%s3 + $0xd0] sm:$0xf]
      %v931 = vld [vmem:[%s3 + $0xd4] sm:$0xf]
      %v932 = vld [vmem:[%s3 + $0xd8] sm:$0xf]
      %v933 = vld [vmem:[%s3 + $0xdc] sm:$0xf]
      %v934 = vld [vmem:[%s3 + $0xe0] sm:$0xf]
      %v935 = vld [vmem:[%s3 + $0xe4] sm:$0xf]
      %v936 = vld [vmem:[%s3 + $0xe8] sm:$0xf]
      %v937 = vld [vmem:[%s3 + $0xec] sm:$0xf]
      %v938 = vld [vmem:[%s3 + $0xf0] sm:$0xf]
      %v939 = vld [vmem:[%s3 + $0xf4] sm:$0xf]
      %v940 = vld [vmem:[%s3 + $0xf8] sm:$0xf]
      %v941 = vld [vmem:[%s3 + $0xfc] sm:$0xf]
      %v942 = vld [vmem:[%s3 + $0x100] sm:$0xf]
      %v943 = vld [vmem:[%s3 + $0x104] sm:$0xf]
      %v944 = vld [vmem:[%s3 + $0x108] sm:$0xf]
      %v945 = vld [vmem:[%s3 + $0x10c] sm:$0xf]
      %v946 = vld [vmem:[%s3 + $0x110] sm:$0xf]
      %v947 = vld [vmem:[%s3 + $0x114] sm:$0xf]
      %v948 = vld [vmem:[%s3 + $0x118] sm:$0xf]
      %v949 = vld [vmem:[%s3 + $0x11c] sm:$0xf]
      %v950 = vld [vmem:[%s3 + $0x120] sm:$0xf]
      %v951 = vld [vmem:[%s3 + $0x124] sm:$0xf]
      %v952 = vld [vmem:[%s3 + $0x128] sm:$0xf]
      %v953 = vld [vmem:[%s3 + $0x12c] sm:$0xf]
      %v954 = vld [vmem:[%s3 + $0x130] sm:$0xf]
      %v955 = vld [vmem:[%s3 + $0x134] sm:$0xf]
      %v956 = vld [vmem:[%s3 + $0x138] sm:$0xf]
      %v957 = vld [vmem:[%s3 + $0x13c] sm:$0xf]
      %v958 = vld [vmem:[%s3 + $0x140] sm:$0xf]
      %v959 = vld [vmem:[%s3 + $0x144] sm:$0xf]
      %v960 = vld [vmem:[%s3 + $0x148] sm:$0xf]
      %v961 = vld [vmem:[%s3 + $0x14c] sm:$0xf]
      %v962 = vld [vmem:[%s3 + $0x150] sm:$0xf]
      %v963 = vld [vmem:[%s3 + $0x154] sm:$0xf]
      %v964 = vld [vmem:[%s3 + $0x158] sm:$0xf]
      %v965 = vld [vmem:[%s3 + $0x15c] sm:$0xf]
      %v966 = vld [vmem:[%s3 + $0x160] sm:$0xf]
      %v967 = vld [vmem:[%s3 + $0x164] sm:$0xf]
      %v968 = vld [vmem:[%s3 + $0x168] sm:$0xf]
      %v969 = vld [vmem:[%s3 + $0x16c] sm:$0xf]
      %v970 = vld [vmem:[%s3 + $0x170] sm:$0xf]
      %v971 = vld [vmem:[%s3 + $0x174] sm:$0xf]
      %v972 = vld [vmem:[%s3 + $0x178] sm:$0xf]
      %v973 = vld [vmem:[%s3 + $0x17c] sm:$0xf]
      %v974 = vld [vmem:[%s3 + $0x180] sm:$0xf]
      %v975 = vld [vmem:[%s3 + $0x184] sm:$0xf]
      %v976 = vld [vmem:[%s3 + $0x188] sm:$0xf]
      %v977 = vld [vmem:[%s3 + $0x18c] sm:$0xf]
      %v978 = vld [vmem:[%s3 + $0x190] sm:$0xf]
      %v979 = vld [vmem:[%s3 + $0x194] sm:$0xf]
      %v980 = vld [vmem:[%s3 + $0x198] sm:$0xf]
      %v981 = vld [vmem:[%s3 + $0x19c] sm:$0xf]
      %v982 = vld [vmem:[%s3 + $0x1a0] sm:$0xf]
      %v983 = vld [vmem:[%s3 + $0x1a4] sm:$0xf]
      %v984 = vld [vmem:[%s3 + $0x1a8] sm:$0xf]
      %v985 = vld [vmem:[%s3 + $0x1ac] sm:$0xf]
      %v986 = vld [vmem:[%s3 + $0x1b0] sm:$0xf]
      %v987 = vld [vmem:[%s3 + $0x1b4] sm:$0xf]
      %v988 = vld [vmem:[%s3 + $0x1b8] sm:$0xf]
      %v989 = vld [vmem:[%s3 + $0x1bc] sm:$0xf]
      %v990 = vld [vmem:[%s3 + $0x1c0] sm:$0xf]
      %v991 = vld [vmem:[%s3 + $0x1c4] sm:$0xf]
      %v992 = vld [vmem:[%s3 + $0x1c8] sm:$0xf]
      %v993 = vld [vmem:[%s3 + $0x1cc] sm:$0xf]
      %v994 = vld [vmem:[%s3 + $0x1d0] sm:$0xf]
      %v995 = vld [vmem:[%s3 + $0x1d4] sm:$0xf]
      %v996 = vld [vmem:[%s3 + $0x1d8] sm:$0xf]
      %v997 = vld [vmem:[%s3 + $0x1dc] sm:$0xf]
      %v998 = vld [vmem:[%s3 + $0x1e0] sm:$0xf]
      %v999 = vld [vmem:[%s3 + $0x1e4] sm:$0xf]
      %v1000 = vld [vmem:[%s3 + $0x1e8] sm:$0xf]
      %v1001 = vld [vmem:[%s3 + $0x1ec] sm:$0xf]
      %v1002 = vld [vmem:[%s3 + $0x1f0] sm:$0xf]
      %v1003 = vld [vmem:[%s3 + $0x1f4] sm:$0xf]
      %v1004 = vld [vmem:[%s3 + $0x1f8] sm:$0xf]
      %v1005 = vld [vmem:[%s3 + $0x1fc] sm:$0xf]
      %v1006 = vld [vmem:[%s3 + $0x200] sm:$0xf]
      %v1007 = vld [vmem:[%s3 + $0x204] sm:$0xf]
      %v1008 = vld [vmem:[%s3 + $0x208] sm:$0xf]
      %v1009 = vld [vmem:[%s3 + $0x20c] sm:$0xf]
      %v1010 = vld [vmem:[%s3 + $0x210] sm:$0xf]
      %v1011 = vld [vmem:[%s3 + $0x214] sm:$0xf]
      %v1012 = vld [vmem:[%s3 + $0x218] sm:$0xf]
      %v1013 = vld [vmem:[%s3 + $0x21c] sm:$0xf]
      %v1014 = vld [vmem:[%s3 + $0x220] sm:$0xf]
      %v1015 = vld [vmem:[%s3 + $0x224] sm:$0xf]
      %v1016 = vld [vmem:[%s3 + $0x228] sm:$0xf]
      %v1017 = vld [vmem:[%s3 + $0x22c] sm:$0xf]
      %v1018 = vld [vmem:[%s3 + $0x230] sm:$0xf]
      %v1019 = vld [vmem:[%s3 + $0x234] sm:$0xf]
      %v1020 = vld [vmem:[%s3 + $0x238] sm:$0xf]
      %v1021 = vld [vmem:[%s3 + $0x23c] sm:$0xf]
      %v1022 = vld [vmem:[%s4] sm:$0x1]
      %v1024 = vperm.slane %v1022, 0
      %v1170 = vunpack.c.l.b16 %v878
      %v1171 = vunpack.c.l.b16 %v879
      %v1172 = vunpack.c.l.b16 %v880
      %v1173 = vunpack.c.l.b16 %v881
      %v1174 = vunpack.c.l.b16 %v882
      %v1175 = vunpack.c.l.b16 %v883
      %v1176 = vunpack.c.l.b16 %v884
      %v1177 = vunpack.c.l.b16 %v885
      %v1178 = vunpack.c.l.b16 %v886
      %v1179 = vunpack.c.l.b16 %v887
      %v1180 = vunpack.c.l.b16 %v888
      %v1181 = vunpack.c.l.b16 %v889
      %v1182 = vunpack.c.l.b16 %v890
      %v1183 = vunpack.c.l.b16 %v891
      %v1184 = vunpack.c.l.b16 %v892
      %v1185 = vunpack.c.l.b16 %v893
      %v1186 = vunpack.c.l.b16 %v894
      %v1187 = vunpack.c.l.b16 %v895
      %v1188 = vunpack.c.l.b16 %v896
      %v1189 = vunpack.c.l.b16 %v897
      %v1190 = vunpack.c.l.b16 %v898
      %v1191 = vunpack.c.l.b16 %v899
      %v1192 = vunpack.c.l.b16 %v900
      %v1193 = vunpack.c.l.b16 %v901
      %v1194 = vunpack.c.l.b16 %v902
      %v1195 = vunpack.c.l.b16 %v903
      %v1196 = vunpack.c.l.b16 %v904
      %v1197 = vunpack.c.l.b16 %v905
      %v1198 = vunpack.c.l.b16 %v906
      %v1199 = vunpack.c.l.b16 %v907
      %v1200 = vunpack.c.l.b16 %v908
      %v1201 = vunpack.c.l.b16 %v909
      %v1202 = vunpack.c.l.b16 %v910
      %v1203 = vunpack.c.l.b16 %v911
      %v1204 = vunpack.c.l.b16 %v912
      %v1205 = vunpack.c.l.b16 %v913
      %v1206 = vunpack.c.l.b16 %v914
      %v1207 = vunpack.c.l.b16 %v915
      %v1208 = vunpack.c.l.b16 %v916
      %v1209 = vunpack.c.l.b16 %v917
      %v1210 = vunpack.c.l.b16 %v918
      %v1211 = vunpack.c.l.b16 %v919
      %v1212 = vunpack.c.l.b16 %v920
      %v1213 = vunpack.c.l.b16 %v921
      %v1214 = vunpack.c.l.b16 %v922
      %v1215 = vunpack.c.l.b16 %v923
      %v1216 = vunpack.c.l.b16 %v924
      %v1217 = vunpack.c.l.b16 %v925
      %v1218 = vunpack.c.l.b16 %v926
      %v1219 = vunpack.c.l.b16 %v927
      %v1220 = vunpack.c.l.b16 %v928
      %v1221 = vunpack.c.l.b16 %v929
      %v1222 = vunpack.c.l.b16 %v930
      %v1223 = vunpack.c.l.b16 %v931
      %v1224 = vunpack.c.l.b16 %v932
      %v1225 = vunpack.c.l.b16 %v933
      %v1226 = vunpack.c.l.b16 %v934
      %v1227 = vunpack.c.l.b16 %v935
      %v1228 = vunpack.c.l.b16 %v936
      %v1229 = vunpack.c.l.b16 %v937
      %v1230 = vunpack.c.l.b16 %v938
      %v1231 = vunpack.c.l.b16 %v939
      %v1232 = vunpack.c.l.b16 %v940
      %v1233 = vunpack.c.l.b16 %v941
      %v1234 = vunpack.c.l.b16 %v942
      %v1235 = vunpack.c.l.b16 %v943
      %v1236 = vunpack.c.l.b16 %v944
      %v1237 = vunpack.c.l.b16 %v945
      %v1238 = vunpack.c.l.b16 %v946
      %v1239 = vunpack.c.l.b16 %v947
      %v1240 = vunpack.c.l.b16 %v948
      %v1241 = vunpack.c.l.b16 %v949
      %v1242 = vunpack.c.l.b16 %v950
      %v1243 = vunpack.c.l.b16 %v951
      %v1244 = vunpack.c.l.b16 %v952
      %v1245 = vunpack.c.l.b16 %v953
      %v1246 = vunpack.c.l.b16 %v954
      %v1247 = vunpack.c.l.b16 %v955
      %v1248 = vunpack.c.l.b16 %v956
      %v1249 = vunpack.c.l.b16 %v957
      %v1250 = vunpack.c.l.b16 %v958
      %v1251 = vunpack.c.l.b16 %v959
      %v1252 = vunpack.c.l.b16 %v960
      %v1253 = vunpack.c.l.b16 %v961
      %v1254 = vunpack.c.l.b16 %v962
      %v1255 = vunpack.c.l.b16 %v963
      %v1256 = vunpack.c.l.b16 %v964
      %v1257 = vunpack.c.l.b16 %v965
      %v1258 = vunpack.c.l.b16 %v966
      %v1259 = vunpack.c.l.b16 %v967
      %v1260 = vunpack.c.l.b16 %v968
      %v1261 = vunpack.c.l.b16 %v969
      %v1262 = vunpack.c.l.b16 %v970
      %v1263 = vunpack.c.l.b16 %v971
      %v1264 = vunpack.c.l.b16 %v972
      %v1265 = vunpack.c.l.b16 %v973
      %v1266 = vunpack.c.l.b16 %v974
      %v1267 = vunpack.c.l.b16 %v975
      %v1268 = vunpack.c.l.b16 %v976
      %v1269 = vunpack.c.l.b16 %v977
      %v1270 = vunpack.c.l.b16 %v978
      %v1271 = vunpack.c.l.b16 %v979
      %v1272 = vunpack.c.l.b16 %v980
      %v1273 = vunpack.c.l.b16 %v981
      %v1274 = vunpack.c.l.b16 %v982
      %v1275 = vunpack.c.l.b16 %v983
      %v1276 = vunpack.c.l.b16 %v984
      %v1277 = vunpack.c.l.b16 %v985
      %v1278 = vunpack.c.l.b16 %v986
      %v1279 = vunpack.c.l.b16 %v987
      %v1280 = vunpack.c.l.b16 %v988
      %v1281 = vunpack.c.l.b16 %v989
      %v1282 = vunpack.c.l.b16 %v990
      %v1283 = vunpack.c.l.b16 %v991
      %v1284 = vunpack.c.l.b16 %v992
      %v1285 = vunpack.c.l.b16 %v993
      %v1286 = vunpack.c.l.b16 %v994
      %v1287 = vunpack.c.l.b16 %v995
      %v1288 = vunpack.c.l.b16 %v996
      %v1289 = vunpack.c.l.b16 %v997
      %v1290 = vunpack.c.l.b16 %v998
      %v1291 = vunpack.c.l.b16 %v999
      %v1292 = vunpack.c.l.b16 %v1000
      %v1293 = vunpack.c.l.b16 %v1001
      %v1294 = vunpack.c.l.b16 %v1002
      %v1295 = vunpack.c.l.b16 %v1003
      %v1296 = vunpack.c.l.b16 %v1004
      %v1297 = vunpack.c.l.b16 %v1005
      %v1298 = vunpack.c.l.b16 %v1006
      %v1299 = vunpack.c.l.b16 %v1007
      %v1300 = vunpack.c.l.b16 %v1008
      %v1301 = vunpack.c.l.b16 %v1009
      %v1302 = vunpack.c.l.b16 %v1010
      %v1303 = vunpack.c.l.b16 %v1011
      %v1304 = vunpack.c.l.b16 %v1012
      %v1305 = vunpack.c.l.b16 %v1013
      %v1306 = vunpack.c.l.b16 %v1014
      %v1307 = vunpack.c.l.b16 %v1015
      %v1308 = vunpack.c.l.b16 %v1016
      %v1309 = vunpack.c.l.b16 %v1017
      %v1310 = vunpack.c.l.b16 %v1018
      %v1311 = vunpack.c.l.b16 %v1019
      %v1312 = vunpack.c.l.b16 %v1020
      %v1313 = vunpack.c.l.b16 %v1021
      %v1314 = vpack.c.b16 %v1171, %v1170
      %v1315 = vpack.c.b16 %v1173, %v1172
      %v1316 = vpack.c.b16 %v1175, %v1174
      %v1317 = vpack.c.b16 %v1177, %v1176
      %v1318 = vpack.c.b16 %v1179, %v1178
      %v1319 = vpack.c.b16 %v1181, %v1180
      %v1320 = vpack.c.b16 %v1183, %v1182
      %v1321 = vpack.c.b16 %v1185, %v1184
      %v1322 = vpack.c.b16 %v1187, %v1186
      %v1323 = vpack.c.b16 %v1189, %v1188
      %v1324 = vpack.c.b16 %v1191, %v1190
      %v1325 = vpack.c.b16 %v1193, %v1192
      %v1326 = vpack.c.b16 %v1195, %v1194
      %v1327 = vpack.c.b16 %v1197, %v1196
      %v1328 = vpack.c.b16 %v1199, %v1198
      %v1329 = vpack.c.b16 %v1201, %v1200
      %v1330 = vpack.c.b16 %v1203, %v1202
      %v1331 = vpack.c.b16 %v1205, %v1204
      %v1332 = vpack.c.b16 %v1207, %v1206
      %v1333 = vpack.c.b16 %v1209, %v1208
      %v1334 = vpack.c.b16 %v1211, %v1210
      %v1335 = vpack.c.b16 %v1213, %v1212
      %v1336 = vpack.c.b16 %v1215, %v1214
      %v1337 = vpack.c.b16 %v1217, %v1216
      %v1338 = vpack.c.b16 %v1219, %v1218
      %v1339 = vpack.c.b16 %v1221, %v1220
      %v1340 = vpack.c.b16 %v1223, %v1222
      %v1341 = vpack.c.b16 %v1225, %v1224
      %v1342 = vpack.c.b16 %v1227, %v1226
      %v1343 = vpack.c.b16 %v1229, %v1228
      %v1344 = vpack.c.b16 %v1231, %v1230
      %v1345 = vpack.c.b16 %v1233, %v1232
      %v1346 = vpack.c.b16 %v1235, %v1234
      %v1347 = vpack.c.b16 %v1237, %v1236
      %v1348 = vpack.c.b16 %v1239, %v1238
      %v1349 = vpack.c.b16 %v1241, %v1240
      %v1350 = vpack.c.b16 %v1243, %v1242
      %v1351 = vpack.c.b16 %v1245, %v1244
      %v1352 = vpack.c.b16 %v1247, %v1246
      %v1353 = vpack.c.b16 %v1249, %v1248
      %v1354 = vpack.c.b16 %v1251, %v1250
      %v1355 = vpack.c.b16 %v1253, %v1252
      %v1356 = vpack.c.b16 %v1255, %v1254
      %v1357 = vpack.c.b16 %v1257, %v1256
      %v1358 = vpack.c.b16 %v1259, %v1258
      %v1359 = vpack.c.b16 %v1261, %v1260
      %v1360 = vpack.c.b16 %v1263, %v1262
      %v1361 = vpack.c.b16 %v1265, %v1264
      %v1362 = vpack.c.b16 %v1267, %v1266
      %v1363 = vpack.c.b16 %v1269, %v1268
      %v1364 = vpack.c.b16 %v1271, %v1270
      %v1365 = vpack.c.b16 %v1273, %v1272
      %v1366 = vpack.c.b16 %v1275, %v1274
      %v1367 = vpack.c.b16 %v1277, %v1276
      %v1368 = vpack.c.b16 %v1279, %v1278
      %v1369 = vpack.c.b16 %v1281, %v1280
      %v1370 = vpack.c.b16 %v1283, %v1282
      %v1371 = vpack.c.b16 %v1285, %v1284
      %v1372 = vpack.c.b16 %v1287, %v1286
      %v1373 = vpack.c.b16 %v1289, %v1288
      %v1374 = vpack.c.b16 %v1291, %v1290
      %v1375 = vpack.c.b16 %v1293, %v1292
      %v1376 = vpack.c.b16 %v1295, %v1294
      %v1377 = vpack.c.b16 %v1297, %v1296
      %v1378 = vpack.c.b16 %v1299, %v1298
      %v1379 = vpack.c.b16 %v1301, %v1300
      %v1380 = vpack.c.b16 %v1303, %v1302
      %v1381 = vpack.c.b16 %v1305, %v1304
      %v1382 = vpack.c.b16 %v1307, %v1306
      %v1383 = vpack.c.b16 %v1309, %v1308
      %v1384 = vpack.c.b16 %v1311, %v1310
      %v1385 = vpack.c.b16 %v1313, %v1312
      %1458 = vmatpush.bf16.msra.mxu0 %v1321
      %1459 = vmatpush.bf16.msra.mxu0 %v1320
      %1460 = vmatpush.bf16.msra.mxu0 %v1319
      %1461 = vmatpush.bf16.msra.mxu0 %v1318
      %1462 = vmatpush.bf16.msra.mxu0 %v1317
      %1463 = vmatpush.bf16.msra.mxu0 %v1316
      %1464 = vmatpush.bf16.msra.mxu0 %v1315
      %1465 = vmatpush.bf16.msra.mxu0 %v1314
      %1466 = vmatmul.bf16.gmra.mxu0 %v648
      %v1467 = vpop.f32.mrf.mxu0
      %v1468 = vadd.f32 %v1024, %v1467
      %v1469 = vpop.f32.mrf.mxu0
      %v1470 = vadd.f32 %v1024, %v1469
      %1471 = vmatmul.bf16.gmra.mxu0 %v649
      %v1472 = vpop.f32.mrf.mxu0
      %v1473 = vadd.f32 %v1024, %v1472
      %v1474 = vpop.f32.mrf.mxu0
      %v1475 = vadd.f32 %v1024, %v1474
      %1476 = vmatmul.bf16.gmra.mxu0 %v650
      %v1477 = vpop.f32.mrf.mxu0
      %v1478 = vadd.f32 %v1024, %v1477
      %v1479 = vpop.f32.mrf.mxu0
      %v1480 = vadd.f32 %v1024, %v1479
      %1481 = vmatmul.bf16.gmra.mxu0 %v651
      %v1482 = vpop.f32.mrf.mxu0
      %v1483 = vadd.f32 %v1024, %v1482
      %v1484 = vpop.f32.mrf.mxu0
      %v1485 = vadd.f32 %v1024, %v1484
      %1486 = vmatmul.bf16.gmra.mxu0 %v652
      %v1487 = vpop.f32.mrf.mxu0
      %v1488 = vadd.f32 %v1024, %v1487
      %v1489 = vpop.f32.mrf.mxu0
      %v1490 = vadd.f32 %v1024, %v1489
      %1491 = vmatmul.bf16.gmra.mxu0 %v653
      %v1492 = vpop.f32.mrf.mxu0
      %v1493 = vadd.f32 %v1024, %v1492
      %v1494 = vpop.f32.mrf.mxu0
      %v1495 = vadd.f32 %v1024, %v1494
      %1496 = vmatmul.bf16.gmra.mxu0 %v654
      %v1497 = vpop.f32.mrf.mxu0
      %v1498 = vadd.f32 %v1024, %v1497
      %v1499 = vpop.f32.mrf.mxu0
      %v1500 = vadd.f32 %v1024, %v1499
      %1501 = vmatmul.bf16.gmra.mxu0 %v655
      %v1502 = vpop.f32.mrf.mxu0
      %v1503 = vadd.f32 %v1024, %v1502
      %v1504 = vpop.f32.mrf.mxu0
      %v1505 = vadd.f32 %v1024, %v1504
      %1506 = vdwg.mxu0
      %1507 = vmatpush.bf16.msra.mxu0 %v1329
      %1508 = vmatpush.bf16.msra.mxu0 %v1328
      %1509 = vmatpush.bf16.msra.mxu0 %v1327
      %1510 = vmatpush.bf16.msra.mxu0 %v1326
      %1511 = vmatpush.bf16.msra.mxu0 %v1325
      %1512 = vmatpush.bf16.msra.mxu0 %v1324
      %1513 = vmatpush.bf16.msra.mxu0 %v1323
      %1514 = vmatpush.bf16.msra.mxu0 %v1322
      %1515 = vmatmul.bf16.gmra.mxu0 %v700
      %v1516 = vpop.f32.mrf.mxu0
      %v1517 = vadd.f32 %v1468, %v1516
      %v1518 = vpop.f32.mrf.mxu0
      %v1519 = vadd.f32 %v1470, %v1518
      %1520 = vmatmul.bf16.gmra.mxu0 %v712
      %v1521 = vpop.f32.mrf.mxu0
      %v1522 = vadd.f32 %v1473, %v1521
      %v1523 = vpop.f32.mrf.mxu0
      %v1524 = vadd.f32 %v1475, %v1523
      %1525 = vmatmul.bf16.gmra.mxu0 %v724
      %v1526 = vpop.f32.mrf.mxu0
      %v1527 = vadd.f32 %v1478, %v1526
      %v1528 = vpop.f32.mrf.mxu0
      %v1529 = vadd.f32 %v1480, %v1528
      %1530 = vmatmul.bf16.gmra.mxu0 %v736
      %v1531 = vpop.f32.mrf.mxu0
      %v1532 = vadd.f32 %v1483, %v1531
      %v1533 = vpop.f32.mrf.mxu0
      %v1534 = vadd.f32 %v1485, %v1533
      %1535 = vmatmul.bf16.gmra.mxu0 %v748
      %v1536 = vpop.f32.mrf.mxu0
      %v1537 = vadd.f32 %v1488, %v1536
      %v1538 = vpop.f32.mrf.mxu0
      %v1539 = vadd.f32 %v1490, %v1538
      %1540 = vmatmul.bf16.gmra.mxu0 %v760
      %v1541 = vpop.f32.mrf.mxu0
      %v1542 = vadd.f32 %v1493, %v1541
      %v1543 = vpop.f32.mrf.mxu0
      %v1544 = vadd.f32 %v1495, %v1543
      %1545 = vmatmul.bf16.gmra.mxu0 %v772
      %v1546 = vpop.f32.mrf.mxu0
      %v1547 = vadd.f32 %v1498, %v1546
      %v1548 = vpop.f32.mrf.mxu0
      %v1549 = vadd.f32 %v1500, %v1548
      %1550 = vmatmul.bf16.gmra.mxu0 %v784
      %v1551 = vpop.f32.mrf.mxu0
      %v1552 = vadd.f32 %v1503, %v1551
      %v1553 = vpop.f32.mrf.mxu0
      %v1554 = vadd.f32 %v1505, %v1553
      %1555 = vdwg.mxu0
      %1556 = vmatpush.bf16.msra.mxu0 %v1337
      %1557 = vmatpush.bf16.msra.mxu0 %v1336
      %1558 = vmatpush.bf16.msra.mxu0 %v1335
      %1559 = vmatpush.bf16.msra.mxu0 %v1334
      %1560 = vmatpush.bf16.msra.mxu0 %v1333
      %1561 = vmatpush.bf16.msra.mxu0 %v1332
      %1562 = vmatpush.bf16.msra.mxu0 %v1331
      %1563 = vmatpush.bf16.msra.mxu0 %v1330
      %1564 = vmatmul.bf16.gmra.mxu0 %v796
      %v1565 = vpop.f32.mrf.mxu0
      %v1566 = vadd.f32 %v1517, %v1565
      %v1567 = vpop.f32.mrf.mxu0
      %v1568 = vadd.f32 %v1519, %v1567
      %1569 = vmatmul.bf16.gmra.mxu0 %v799
      %v1570 = vpop.f32.mrf.mxu0
      %v1571 = vadd.f32 %v1522, %v1570
      %v1572 = vpop.f32.mrf.mxu0
      %v1573 = vadd.f32 %v1524, %v1572
      %1574 = vmatmul.bf16.gmra.mxu0 %v802
      %v1575 = vpop.f32.mrf.mxu0
      %v1576 = vadd.f32 %v1527, %v1575
      %v1577 = vpop.f32.mrf.mxu0
      %v1578 = vadd.f32 %v1529, %v1577
      %1579 = vmatmul.bf16.gmra.mxu0 %v805
      %v1580 = vpop.f32.mrf.mxu0
      %v1581 = vadd.f32 %v1532, %v1580
      %v1582 = vpop.f32.mrf.mxu0
      %v1583 = vadd.f32 %v1534, %v1582
      %1584 = vmatmul.bf16.gmra.mxu0 %v808
      %v1585 = vpop.f32.mrf.mxu0
      %v1586 = vadd.f32 %v1537, %v1585
      %v1587 = vpop.f32.mrf.mxu0
      %v1588 = vadd.f32 %v1539, %v1587
      %1589 = vmatmul.bf16.gmra.mxu0 %v811
      %v1590 = vpop.f32.mrf.mxu0
      %v1591 = vadd.f32 %v1542, %v1590
      %v1592 = vpop.f32.mrf.mxu0
      %v1593 = vadd.f32 %v1544, %v1592
      %1594 = vmatmul.bf16.gmra.mxu0 %v814
      %v1595 = vpop.f32.mrf.mxu0
      %v1596 = vadd.f32 %v1547, %v1595
      %v1597 = vpop.f32.mrf.mxu0
      %v1598 = vadd.f32 %v1549, %v1597
      %1599 = vmatmul.bf16.gmra.mxu0 %v817
      %v1600 = vpop.f32.mrf.mxu0
      %v1601 = vadd.f32 %v1552, %v1600
      %v1602 = vpop.f32.mrf.mxu0
      %v1603 = vadd.f32 %v1554, %v1602
      %1604 = vdwg.mxu0
      %1605 = vmatpush.bf16.msra.mxu0 %v1345
      %1606 = vmatpush.bf16.msra.mxu0 %v1344
      %1607 = vmatpush.bf16.msra.mxu0 %v1343
      %1608 = vmatpush.bf16.msra.mxu0 %v1342
      %1609 = vmatpush.bf16.msra.mxu0 %v1341
      %1610 = vmatpush.bf16.msra.mxu0 %v1340
      %1611 = vmatpush.bf16.msra.mxu0 %v1339
      %1612 = vmatpush.bf16.msra.mxu0 %v1338
      %1613 = vmatmul.bf16.gmra.mxu0 %v649
      %v1614 = vpop.f32.mrf.mxu0
      %v1615 = vadd.f32 %v1566, %v1614
      %v1616 = vpop.f32.mrf.mxu0
      %v1617 = vadd.f32 %v1568, %v1616
      %1618 = vmatmul.bf16.gmra.mxu0 %v650
      %v1619 = vpop.f32.mrf.mxu0
      %v1620 = vadd.f32 %v1571, %v1619
      %v1621 = vpop.f32.mrf.mxu0
      %v1622 = vadd.f32 %v1573, %v1621
      %1623 = vmatmul.bf16.gmra.mxu0 %v651
      %v1624 = vpop.f32.mrf.mxu0
      %v1625 = vadd.f32 %v1576, %v1624
      %v1626 = vpop.f32.mrf.mxu0
      %v1627 = vadd.f32 %v1578, %v1626
      %1628 = vmatmul.bf16.gmra.mxu0 %v652
      %v1629 = vpop.f32.mrf.mxu0
      %v1630 = vadd.f32 %v1581, %v1629
      %v1631 = vpop.f32.mrf.mxu0
      %v1632 = vadd.f32 %v1583, %v1631
      %1633 = vmatmul.bf16.gmra.mxu0 %v653
      %v1634 = vpop.f32.mrf.mxu0
      %v1635 = vadd.f32 %v1586, %v1634
      %v1636 = vpop.f32.mrf.mxu0
      %v1637 = vadd.f32 %v1588, %v1636
      %1638 = vmatmul.bf16.gmra.mxu0 %v654
      %v1639 = vpop.f32.mrf.mxu0
      %v1640 = vadd.f32 %v1591, %v1639
      %v1641 = vpop.f32.mrf.mxu0
      %v1642 = vadd.f32 %v1593, %v1641
      %1643 = vmatmul.bf16.gmra.mxu0 %v655
      %v1644 = vpop.f32.mrf.mxu0
      %v1645 = vadd.f32 %v1596, %v1644
      %v1646 = vpop.f32.mrf.mxu0
      %v1647 = vadd.f32 %v1598, %v1646
      %1648 = vmatmul.bf16.gmra.mxu0 %v830
      %v1649 = vpop.f32.mrf.mxu0
      %v1650 = vadd.f32 %v1601, %v1649
      %v1651 = vpop.f32.mrf.mxu0
      %v1652 = vadd.f32 %v1603, %v1651
      %1653 = vdwg.mxu0
      %1654 = vmatpush.bf16.msra.mxu0 %v1353
      %1655 = vmatpush.bf16.msra.mxu0 %v1352
      %1656 = vmatpush.bf16.msra.mxu0 %v1351
      %1657 = vmatpush.bf16.msra.mxu0 %v1350
      %1658 = vmatpush.bf16.msra.mxu0 %v1349
      %1659 = vmatpush.bf16.msra.mxu0 %v1348
      %1660 = vmatpush.bf16.msra.mxu0 %v1347
      %1661 = vmatpush.bf16.msra.mxu0 %v1346
      %1662 = vmatmul.bf16.gmra.mxu0 %v712
      %v1663 = vpop.f32.mrf.mxu0
      %v1664 = vadd.f32 %v1615, %v1663
      %v1665 = vpop.f32.mrf.mxu0
      %v1666 = vadd.f32 %v1617, %v1665
      %1667 = vmatmul.bf16.gmra.mxu0 %v724
      %v1668 = vpop.f32.mrf.mxu0
      %v1669 = vadd.f32 %v1620, %v1668
      %v1670 = vpop.f32.mrf.mxu0
      %v1671 = vadd.f32 %v1622, %v1670
      %1672 = vmatmul.bf16.gmra.mxu0 %v736
      %v1673 = vpop.f32.mrf.mxu0
      %v1674 = vadd.f32 %v1625, %v1673
      %v1675 = vpop.f32.mrf.mxu0
      %v1676 = vadd.f32 %v1627, %v1675
      %1677 = vmatmul.bf16.gmra.mxu0 %v748
      %v1678 = vpop.f32.mrf.mxu0
      %v1679 = vadd.f32 %v1630, %v1678
      %v1680 = vpop.f32.mrf.mxu0
      %v1681 = vadd.f32 %v1632, %v1680
      %1682 = vmatmul.bf16.gmra.mxu0 %v760
      %v1683 = vpop.f32.mrf.mxu0
      %v1684 = vadd.f32 %v1635, %v1683
      %v1685 = vpop.f32.mrf.mxu0
      %v1686 = vadd.f32 %v1637, %v1685
      %1687 = vmatmul.bf16.gmra.mxu0 %v772
      %v1688 = vpop.f32.mrf.mxu0
      %v1689 = vadd.f32 %v1640, %v1688
      %v1690 = vpop.f32.mrf.mxu0
      %v1691 = vadd.f32 %v1642, %v1690
      %1692 = vmatmul.bf16.gmra.mxu0 %v784
      %v1693 = vpop.f32.mrf.mxu0
      %v1694 = vadd.f32 %v1645, %v1693
      %v1695 = vpop.f32.mrf.mxu0
      %v1696 = vadd.f32 %v1647, %v1695
      %1697 = vmatmul.bf16.gmra.mxu0 %v846
      %v1698 = vpop.f32.mrf.mxu0
      %v1699 = vadd.f32 %v1650, %v1698
      %v1700 = vpop.f32.mrf.mxu0
      %v1701 = vadd.f32 %v1652, %v1700
      %1702 = vdwg.mxu0
      %1703 = vmatpush.bf16.msra.mxu0 %v1361
      %1704 = vmatpush.bf16.msra.mxu0 %v1360
      %1705 = vmatpush.bf16.msra.mxu0 %v1359
      %1706 = vmatpush.bf16.msra.mxu0 %v1358
      %1707 = vmatpush.bf16.msra.mxu0 %v1357
      %1708 = vmatpush.bf16.msra.mxu0 %v1356
      %1709 = vmatpush.bf16.msra.mxu0 %v1355
      %1710 = vmatpush.bf16.msra.mxu0 %v1354
      %1711 = vmatmul.bf16.gmra.mxu0 %v799
      %v1712 = vpop.f32.mrf.mxu0
      %v1713 = vadd.f32 %v1664, %v1712
      %v1714 = vpop.f32.mrf.mxu0
      %v1715 = vadd.f32 %v1666, %v1714
      %1716 = vmatmul.bf16.gmra.mxu0 %v802
      %v1717 = vpop.f32.mrf.mxu0
      %v1718 = vadd.f32 %v1669, %v1717
      %v1719 = vpop.f32.mrf.mxu0
      %v1720 = vadd.f32 %v1671, %v1719
      %1721 = vmatmul.bf16.gmra.mxu0 %v805
      %v1722 = vpop.f32.mrf.mxu0
      %v1723 = vadd.f32 %v1674, %v1722
      %v1724 = vpop.f32.mrf.mxu0
      %v1725 = vadd.f32 %v1676, %v1724
      %1726 = vmatmul.bf16.gmra.mxu0 %v808
      %v1727 = vpop.f32.mrf.mxu0
      %v1728 = vadd.f32 %v1679, %v1727
      %v1729 = vpop.f32.mrf.mxu0
      %v1730 = vadd.f32 %v1681, %v1729
      %1731 = vmatmul.bf16.gmra.mxu0 %v811
      %v1732 = vpop.f32.mrf.mxu0
      %v1733 = vadd.f32 %v1684, %v1732
      %v1734 = vpop.f32.mrf.mxu0
      %v1735 = vadd.f32 %v1686, %v1734
      %1736 = vmatmul.bf16.gmra.mxu0 %v814
      %v1737 = vpop.f32.mrf.mxu0
      %v1738 = vadd.f32 %v1689, %v1737
      %v1739 = vpop.f32.mrf.mxu0
      %v1740 = vadd.f32 %v1691, %v1739
      %1741 = vmatmul.bf16.gmra.mxu0 %v817
      %v1742 = vpop.f32.mrf.mxu0
      %v1743 = vadd.f32 %v1694, %v1742
      %v1744 = vpop.f32.mrf.mxu0
      %v1745 = vadd.f32 %v1696, %v1744
      %1746 = vmatmul.bf16.gmra.mxu0 %v850
      %v1747 = vpop.f32.mrf.mxu0
      %v1748 = vadd.f32 %v1699, %v1747
      %v1749 = vpop.f32.mrf.mxu0
      %v1750 = vadd.f32 %v1701, %v1749
      %1751 = vdwg.mxu0
      %1752 = vmatpush.bf16.msra.mxu0 %v1369
      %1753 = vmatpush.bf16.msra.mxu0 %v1368
      %1754 = vmatpush.bf16.msra.mxu0 %v1367
      %1755 = vmatpush.bf16.msra.mxu0 %v1366
      %1756 = vmatpush.bf16.msra.mxu0 %v1365
      %1757 = vmatpush.bf16.msra.mxu0 %v1364
      %1758 = vmatpush.bf16.msra.mxu0 %v1363
      %1759 = vmatpush.bf16.msra.mxu0 %v1362
      %1760 = vmatmul.bf16.gmra.mxu0 %v650
      %v1761 = vpop.f32.mrf.mxu0
      %v1762 = vadd.f32 %v1713, %v1761
      %v1763 = vpop.f32.mrf.mxu0
      %v1764 = vadd.f32 %v1715, %v1763
      %1765 = vmatmul.bf16.gmra.mxu0 %v651
      %v1766 = vpop.f32.mrf.mxu0
      %v1767 = vadd.f32 %v1718, %v1766
      %v1768 = vpop.f32.mrf.mxu0
      %v1769 = vadd.f32 %v1720, %v1768
      %1770 = vmatmul.bf16.gmra.mxu0 %v652
      %v1771 = vpop.f32.mrf.mxu0
      %v1772 = vadd.f32 %v1723, %v1771
      %v1773 = vpop.f32.mrf.mxu0
      %v1774 = vadd.f32 %v1725, %v1773
      %1775 = vmatmul.bf16.gmra.mxu0 %v653
      %v1776 = vpop.f32.mrf.mxu0
      %v1777 = vadd.f32 %v1728, %v1776
      %v1778 = vpop.f32.mrf.mxu0
      %v1779 = vadd.f32 %v1730, %v1778
      %1780 = vmatmul.bf16.gmra.mxu0 %v654
      %v1781 = vpop.f32.mrf.mxu0
      %v1782 = vadd.f32 %v1733, %v1781
      %v1783 = vpop.f32.mrf.mxu0
      %v1784 = vadd.f32 %v1735, %v1783
      %1785 = vmatmul.bf16.gmra.mxu0 %v655
      %v1786 = vpop.f32.mrf.mxu0
      %v1787 = vadd.f32 %v1738, %v1786
      %v1788 = vpop.f32.mrf.mxu0
      %v1789 = vadd.f32 %v1740, %v1788
      %1790 = vmatmul.bf16.gmra.mxu0 %v830
      %v1791 = vpop.f32.mrf.mxu0
      %v1792 = vadd.f32 %v1743, %v1791
      %v1793 = vpop.f32.mrf.mxu0
      %v1794 = vadd.f32 %v1745, %v1793
      %1795 = vmatmul.bf16.gmra.mxu0 %v856
      %v1796 = vpop.f32.mrf.mxu0
      %v1797 = vadd.f32 %v1748, %v1796
      %v1798 = vpop.f32.mrf.mxu0
      %v1799 = vadd.f32 %v1750, %v1798
      %1800 = vdwg.mxu0
      %1801 = vmatpush.bf16.msra.mxu0 %v1377
      %1802 = vmatpush.bf16.msra.mxu0 %v1376
      %1803 = vmatpush.bf16.msra.mxu0 %v1375
      %1804 = vmatpush.bf16.msra.mxu0 %v1374
      %1805 = vmatpush.bf16.msra.mxu0 %v1373
      %1806 = vmatpush.bf16.msra.mxu0 %v1372
      %1807 = vmatpush.bf16.msra.mxu0 %v1371
      %1808 = vmatpush.bf16.msra.mxu0 %v1370
      %1809 = vmatmul.bf16.gmra.mxu0 %v724
      %v1810 = vpop.f32.mrf.mxu0
      %v1811 = vadd.f32 %v1762, %v1810
      %v1812 = vpop.f32.mrf.mxu0
      %v1813 = vadd.f32 %v1764, %v1812
      %1814 = vmatmul.bf16.gmra.mxu0 %v736
      %v1815 = vpop.f32.mrf.mxu0
      %v1816 = vadd.f32 %v1767, %v1815
      %v1817 = vpop.f32.mrf.mxu0
      %v1818 = vadd.f32 %v1769, %v1817
      %1819 = vmatmul.bf16.gmra.mxu0 %v748
      %v1820 = vpop.f32.mrf.mxu0
      %v1821 = vadd.f32 %v1772, %v1820
      %v1822 = vpop.f32.mrf.mxu0
      %v1823 = vadd.f32 %v1774, %v1822
      %1824 = vmatmul.bf16.gmra.mxu0 %v760
      %v1825 = vpop.f32.mrf.mxu0
      %v1826 = vadd.f32 %v1777, %v1825
      %v1827 = vpop.f32.mrf.mxu0
      %v1828 = vadd.f32 %v1779, %v1827
      %1829 = vmatmul.bf16.gmra.mxu0 %v772
      %v1830 = vpop.f32.mrf.mxu0
      %v1831 = vadd.f32 %v1782, %v1830
      %v1832 = vpop.f32.mrf.mxu0
      %v1833 = vadd.f32 %v1784, %v1832
      %1834 = vmatmul.bf16.gmra.mxu0 %v784
      %v1835 = vpop.f32.mrf.mxu0
      %v1836 = vadd.f32 %v1787, %v1835
      %v1837 = vpop.f32.mrf.mxu0
      %v1838 = vadd.f32 %v1789, %v1837
      %1839 = vmatmul.bf16.gmra.mxu0 %v846
      %v1840 = vpop.f32.mrf.mxu0
      %v1841 = vadd.f32 %v1792, %v1840
      %v1842 = vpop.f32.mrf.mxu0
      %v1843 = vadd.f32 %v1794, %v1842
      %1844 = vmatmul.bf16.gmra.mxu0 %v872
      %v1845 = vpop.f32.mrf.mxu0
      %v1846 = vadd.f32 %v1797, %v1845
      %v1847 = vpop.f32.mrf.mxu0
      %v1848 = vadd.f32 %v1799, %v1847
      %1849 = vdwg.mxu0
      %1850 = vmatpush.bf16.msra.mxu0 %v1385
      %1851 = vmatpush.bf16.msra.mxu0 %v1384
      %1852 = vmatpush.bf16.msra.mxu0 %v1383
      %1853 = vmatpush.bf16.msra.mxu0 %v1382
      %1854 = vmatpush.bf16.msra.mxu0 %v1381
      %1855 = vmatpush.bf16.msra.mxu0 %v1380
      %1856 = vmatpush.bf16.msra.mxu0 %v1379
      %1857 = vmatpush.bf16.msra.mxu0 %v1378
      %1858 = vmatmul.bf16.gmra.mxu0 %v802
      %v1859 = vpop.f32.mrf.mxu0
      %v1860 = vadd.f32 %v1811, %v1859
      %v1861 = vpop.f32.mrf.mxu0
      %v1862 = vadd.f32 %v1813, %v1861
      %1863 = vmatmul.bf16.gmra.mxu0 %v805
      %v1864 = vpop.f32.mrf.mxu0
      %v1865 = vadd.f32 %v1816, %v1864
      %v1866 = vpop.f32.mrf.mxu0
      %v1867 = vadd.f32 %v1818, %v1866
      %1868 = vmatmul.bf16.gmra.mxu0 %v808
      %v1869 = vpop.f32.mrf.mxu0
      %v1870 = vadd.f32 %v1821, %v1869
      %v1871 = vpop.f32.mrf.mxu0
      %v1872 = vadd.f32 %v1823, %v1871
      %1873 = vmatmul.bf16.gmra.mxu0 %v811
      %v1874 = vpop.f32.mrf.mxu0
      %v1875 = vadd.f32 %v1826, %v1874
      %v1876 = vpop.f32.mrf.mxu0
      %v1877 = vadd.f32 %v1828, %v1876
      %1878 = vmatmul.bf16.gmra.mxu0 %v814
      %v1879 = vpop.f32.mrf.mxu0
      %v1880 = vadd.f32 %v1831, %v1879
      %v1881 = vpop.f32.mrf.mxu0
      %v1882 = vadd.f32 %v1833, %v1881
      %1883 = vmatmul.bf16.gmra.mxu0 %v817
      %v1884 = vpop.f32.mrf.mxu0
      %v1885 = vadd.f32 %v1836, %v1884
      %v1886 = vpop.f32.mrf.mxu0
      %v1887 = vadd.f32 %v1838, %v1886
      %1888 = vmatmul.bf16.gmra.mxu0 %v850
      %v1889 = vpop.f32.mrf.mxu0
      %v1890 = vadd.f32 %v1841, %v1889
      %v1891 = vpop.f32.mrf.mxu0
      %v1892 = vadd.f32 %v1843, %v1891
      %1893 = vmatmul.bf16.gmra.mxu0 %v876
      %v1894 = vpop.f32.mrf.mxu0
      %v1895 = vadd.f32 %v1846, %v1894
      %v1896 = vpop.f32.mrf.mxu0
      %v1897 = vadd.f32 %v1848, %v1896
      %1898 = vdwg.mxu0
      %1899 = vst [vmem:[%s260] sm:$0xff] %v1860
      %1900 = vst [vmem:[%s260 + $0x8] sm:$0xff] %v1862
      %1901 = vst [vmem:[%s260 + $0x10] sm:$0xff] %v1865
      %1902 = vst [vmem:[%s260 + $0x18] sm:$0xff] %v1867
      %1903 = vst [vmem:[%s260 + $0x20] sm:$0xff] %v1870
      %1904 = vst [vmem:[%s260 + $0x28] sm:$0xff] %v1872
      %1905 = vst [vmem:[%s260 + $0x30] sm:$0xff] %v1875
      %1906 = vst [vmem:[%s260 + $0x38] sm:$0xff] %v1877
      %1907 = vst [vmem:[%s260 + $0x40] sm:$0xff] %v1880
      %1908 = vst [vmem:[%s260 + $0x48] sm:$0xff] %v1882
      %1909 = vst [vmem:[%s260 + $0x50] sm:$0xff] %v1885
      %1910 = vst [vmem:[%s260 + $0x58] sm:$0xff] %v1887
      %1911 = vst [vmem:[%s260 + $0x60] sm:$0xff] %v1890
      %1912 = vst [vmem:[%s260 + $0x68] sm:$0xff] %v1892
      %1913 = vst [vmem:[%s260 + $0x70] sm:$0xff] %v1895
      %1914 = vst [vmem:[%s260 + $0x78] sm:$0xff] %v1897
      %s1915 = smul.u32 16, %s21
      %p1916 = scmp.lt.s32.totalorder %s20, 1
      %s1917 = scalar_select %p1916, %s20, 1
      %p1918 = scmp.lt.s32.totalorder %s1915, 31
      %s1919 = scalar_select %p1918, %s1915, 31
      %s1920 = smul.addr %s1917, 32
      %s1921 = sadd.s32 %s1919, %s1920
      %s1922 = smul.addr %s1921, 8
      %s1923 = scalar_lea.vmem %s5, %s1922
      // Predicated region
      $region41: #{dense_block_forward.2} parent=39 // pred_check
        %p1924 = pneg %p160
      $region42: #{dense_block_forward.2} parent=39 // pred_check_branch
        %1926 = sbr.rel (%p1924) target = $region44
      $region43: #{dense_block_forward.2} parent=39 // pred_region
        %s1927 = smul.u32 16, %s21
      $region44: #{dense_block_forward.2} parent=39 // pred_fallthru
        _
    $region40: #{dense_block_forward.2} parent=5 // pred_fallthru
      _
    %p1928 = scmp.le.s32.totalorder 2, %s11
    // Predicated region
    $region45: #{dense_block_forward.2} parent=5 // pred_check
      %p1929 = pneg %p1928
    $region46: #{dense_block_forward.2} parent=5 // pred_check_branch
      %1931 = sbr.rel (%p1929) target = $region48
    $region47: #{dense_block_forward.2} parent=5 // pred_region
      %s1932 = ssub.s32 %s11, 2
      // Predicated region
      $region49: #{dense_block_forward.2} parent=47 // pred_check
        %p1933 = pneg %p166
      $region50: #{dense_block_forward.2} parent=47 // pred_check_branch
        %1935 = sbr.rel (%p1933) target = $region52
      $region51: #{dense_block_forward.2} parent=47 // pred_region
        %s1936 = smul.u32 16, %s23
        %p1937 = scmp.lt.s32.totalorder %s22, 1
        %s1938 = scalar_select %p1937, %s22, 1
        %p1939 = scmp.lt.s32.totalorder %s1936, 31
        %s1940 = scalar_select %p1939, %s1936, 31
        %s1941 = smul.addr %s1938, 32
        %s1942 = sadd.s32 %s1940, %s1941
        %s1943 = smul.addr %s1942, 8
        %s1944 = scalar_lea.vmem %s5, %s1943
      $region52: #{dense_block_forward.2} parent=47 // pred_fallthru
        _
    $region48: #{dense_block_forward.2} parent=5 // pred_fallthru
      _
  $region6: #{dense_block_forward.2} parent=0 // loop_footer
    %s15 = sadd.s32 1, %s11
  $region7: #{dense_block_forward.2} parent=0 // loop_footer_branch
    %10 = sbr.rel target = $region3
  $region8: #{dense_block_forward.2} parent=0 // loop_exit
    _

</llo_original>
